<compile_context>
chip_gen: v6e
topology: v6e:2x2x1
jax: 0.10.0
libtpu: 0.0.40
codegen_flags: <defaults>
</compile_context>

<pallas_src>
import functools
import math

import jax
import jax.numpy as jnp
from jax.experimental import pallas as pl
from jax.experimental.pallas import tpu as pltpu

LANE = 128
MXU_DTYPE = jnp.bfloat16            # MXU operand dtype; accumulation stays f32


def _round_up(x, m):
    return (x + m - 1) // m * m


def _vmem_limit_bytes():
    # Generation-aware scoped-VMEM limit: ~3/4 of physical (leaves headroom for
    # double-buffering / compiler scratch).  v5e/v6e: 128 MiB -> 96 MiB;
    # v7x: 64 MiB -> 48 MiB.  Conservative fallback if the query fails.
    try:
        cap = int(pltpu.get_tpu_info().vmem_capacity_bytes)
        return max(32 * 1024 * 1024, (cap * 3) // 4)
    except Exception:
        return 48 * 1024 * 1024


VMEM_LIMIT = _vmem_limit_bytes()


# ----------------------------------------------------------------------------
# One-time (per model) preprocessing: padded / transposed / normalized / bf16
# weights plus the halo boundary masks.  Input independent -> NOT in the
# jitted per-call forward.
# ----------------------------------------------------------------------------
def prepare_params(params, x_shape, *, scale=30.0, tile_k=256, bn_eps=1e-5,
                   max_bb=8):
    B, Cin, H, W = x_shape
    HW = H * W
    assert HW % LANE == 0, "H*W must be a multiple of 128 lanes"

    Cout = params["conv_w"].shape[0]
    Cp = _round_up(Cout, LANE)
    PC = 2 * Cp
    R = _round_up(9 * Cin, 16)                       # bf16 sublane tile = 16
    F = params["fc_w"].shape[0]
    Fp = _round_up(F, LANE)
    K = params["prod_w"].shape[0]
    tile_k = min(tile_k, _round_up(K, LANE))
    Kp = _round_up(K, tile_k)

    # How many images per K1 grid step: amortizes per-step overhead and fills
    # the MXU spatial/batch axis, subject to a conservative VMEM budget.
    budget = VMEM_LIMIT // 2
    Bb = 1
    for cand in range(1, min(B, max_bb) + 1):
        if B % cand:
            continue
        need = (R * cand * HW * 2                    # bf16 patch scratch
                + 2 * Cin * cand * HW * 4            # double-buffered input
                + 2 * cand * PC * 4                  # double-buffered output
                + 9 * cand * HW * 4                  # halo masks (resident)
                + R * Cp * 2 + Cp * 4)               # conv weight / bias
        if need <= budget:
            Bb = cand

    # -- K1: conv weight in (kh, kw, ci) patch order, row-padded to R, bf16 --
    w_t = jnp.transpose(params["conv_w"], (2, 3, 1, 0)).reshape(9 * Cin, Cout)
    conv_w = (jnp.zeros((R, Cp), jnp.float32)
              .at[:9 * Cin, :Cout].set(w_t)).astype(MXU_DTYPE)
    conv_b = jnp.zeros((1, Cp), jnp.float32).at[0, :Cout].set(params["conv_b"])

    # -- K1: halo boundary masks, one row per 3x3 shift; the same mask also
    #        kills cross-image bleed between the Bb images packed on the lane
    #        axis (any wrap-around position is a padded-border position).
    pos = jnp.arange(HW, dtype=jnp.int32)
    row = pos // W
    col = pos % W
    ones = jnp.ones((HW,), bool)
    rows_ok = {0: row >= 1, 1: ones, 2: row <= H - 2}
    cols_ok = {0: col >= 1, 1: ones, 2: col <= W - 2}
    mask = jnp.stack(
        [jnp.logical_and(rows_ok[di], cols_ok[dj]).astype(jnp.float32)
         for di in range(3) for dj in range(3)], axis=0)           # (9, HW)
    halo_mask = jnp.tile(mask, (1, Bb))                            # (9, Bb*HW)

    # -- K2: fc weight scattered into the padded pooled layout
    #        [max: 0..Cout-1 | pad | avg: Cp..Cp+Cout-1 | pad], bf16 ----------
    fc_w = jnp.zeros((PC, Fp), jnp.float32)
    fc_w = fc_w.at[:Cout, :F].set(params["fc_w"][:, :Cout].T)      # max half
    fc_w = fc_w.at[Cp:Cp + Cout, :F].set(params["fc_w"][:, Cout:].T)  # avg half
    fc_w = fc_w.astype(MXU_DTYPE)
    fc_b = jnp.zeros((1, Fp), jnp.float32).at[0, :F].set(params["fc_b"])
    bn_g = jnp.zeros((1, Fp), jnp.float32).at[0, :F].set(params["bn_gamma"])
    bn_b = jnp.zeros((1, Fp), jnp.float32).at[0, :F].set(params["bn_beta"])

    # -- K3: class weights L2-normalized, pre-scaled by s, padded, bf16 -------
    w = jnp.zeros((Kp, Fp), jnp.float32).at[:K, :F].set(params["prod_w"])
    wn = w * jax.lax.rsqrt(jnp.sum(w * w, axis=1, keepdims=True) + 1e-12)
    cls_w = (scale * wn).astype(MXU_DTYPE)

    arrays = {
        "conv_w": conv_w, "conv_b": conv_b, "halo_mask": halo_mask,
        "fc_w": fc_w, "fc_b": fc_b, "bn_gamma": bn_g, "bn_beta": bn_b,
        "cls_w": cls_w,
    }
    cfg = dict(B=B, Cin=Cin, H=H, W=W, Cout=Cout, Cp=Cp, PC=PC, R=R, Bb=Bb,
               F=F, Fp=Fp, K=K, Kp=Kp, tile_k=tile_k, bn_eps=bn_eps)
    return arrays, cfg


# ----------------------------------------------------------------------------
# Kernel 1: fused 3x3 conv (pad=1) + bias + ReLU + AdaptiveConcatPool2d(1).
# Bb images per grid step; grid axis is "parallel" (megacore / 2 TCs).
# ----------------------------------------------------------------------------
def conv_pool_kernel(x_ref, w_ref, b_ref, m_ref, o_ref, patch_ref, *,
                     H, W, Cin, Bb, R, Cp):
    HW = H * W
    N = Bb * HW
    x = x_ref[...]                                       # (Cin, Bb*HW) f32
    masks = m_ref[...]                                   # (9, Bb*HW)   f32

    # Zero the sublane-alignment pad rows (uninitialized VMEM could hold NaNs
    # and must not reach the MXU, even against zero weight rows).
    if R > 9 * Cin:
        patch_ref[9 * Cin:, :] = jnp.zeros((R - 9 * Cin, N), MXU_DTYPE)

    # In-VMEM halo/im2col: 9 lane-rolled views of x, boundary zeroing via one
    # precomputed-mask multiply per shift, stored directly as bf16.
    for di in range(3):
        for dj in range(3):
            s = di * 3 + dj
            off = (di - 1) * W + (dj - 1)
            v = x if off == 0 else pltpu.roll(x, shift=(-off) % N, axis=1)
            if not (di == 1 and dj == 1):                # center mask is all-1
                v = v * masks[s:s + 1, :]
            patch_ref[s * Cin:(s + 1) * Cin, :] = v.astype(MXU_DTYPE)

    # (Bb*HW, Cp) = patches^T @ W : contract dim 0 of both operands (no
    # materialized transpose); bf16 operands, f32 accumulation on the MXU.
    y = jax.lax.dot_general(
        patch_ref[...], w_ref[...],
        dimension_numbers=(((0,), (0,)), ((), ())),
        preferred_element_type=jnp.float32)              # (Bb*HW, Cp)
    y = jnp.maximum(y + b_ref[...], 0.0)                 # bias + ReLU (f32)

    # Fused AdaptiveConcatPool2d epilogue per image: [max | avg] over spatial.
    y = y.reshape(Bb, HW, Cp)
    mx = jnp.max(y, axis=1)                              # (Bb, Cp)
    av = jnp.sum(y, axis=1) * (1.0 / HW)                 # (Bb, Cp)
    o_ref[0] = jnp.concatenate([mx, av], axis=1)         # (Bb, 2*Cp)


def conv3x3_relu_concat_pool(x, arrays, cfg):
    """x: (B, Cin, H, W) NCHW -> pooled (B, 2*Cp), layout [max(Cp)|avg(Cp)]."""
    B, Cin, H, W = cfg["B"], cfg["Cin"], cfg["H"], cfg["W"]
    HW = H * W
    Bb, R, Cp, PC = cfg["Bb"], cfg["R"], cfg["Cp"], cfg["PC"]
    nb = B // Bb

    # NCHW -> (Cin, B*HW): one cheap per-call layout change so each grid step
    # reads a lane-contiguous (Cin, Bb*HW) slab and builds patches with rolls.
    x2 = jnp.transpose(x.reshape(B, Cin, HW), (1, 0, 2)).reshape(Cin, B * HW)

    kern = functools.partial(conv_pool_kernel, H=H, W=W, Cin=Cin, Bb=Bb,
                             R=R, Cp=Cp)
    flops = 2 * B * HW * R * Cp
    bytes_accessed = (B * Cin * HW * 4 + R * Cp * 2 + Cp * 4
                      + 9 * Bb * HW * 4 + B * PC * 4)

    pooled = pl.pallas_call(
        kern,
        out_shape=jax.ShapeDtypeStruct((nb, Bb, PC), jnp.float32),
        grid=(nb,),
        in_specs=[
            pl.BlockSpec((Cin, Bb * HW), lambda b: (0, b)),
            pl.BlockSpec((R, Cp), lambda b: (0, 0)),
            pl.BlockSpec((1, Cp), lambda b: (0, 0)),
            pl.BlockSpec((9, Bb * HW), lambda b: (0, 0)),
        ],
        out_specs=pl.BlockSpec((1, Bb, PC), lambda b: (b, 0, 0)),
        scratch_shapes=[pltpu.VMEM((R, Bb * HW), MXU_DTYPE)],
        compiler_params=pltpu.CompilerParams(
            dimension_semantics=("parallel",),
            vmem_limit_bytes=VMEM_LIMIT),
        cost_estimate=pl.CostEstimate(
            flops=flops, transcendentals=0, bytes_accessed=bytes_accessed),
    )(x2, arrays["conv_w"], arrays["conv_b"], arrays["halo_mask"])

    return pooled.reshape(B, PC)


# ----------------------------------------------------------------------------
# Kernel 2 (fused): embedding head prologue + class-tiled cosine product.
#   Prologue (first class tile only): ReLU -> Linear -> ReLU -> BatchNorm1d
#   (batch stats, f32) -> L2-normalize, written to a VMEM scratch that every
#   class tile reuses.  Body: s*cos(theta) against pre-normalized, pre-scaled
#   bf16 class weights streamed tile_k classes at a time.
# ----------------------------------------------------------------------------
def embed_cosine_kernel(pool_ref, w_ref, b_ref, g_ref, be_ref, cls_ref,
                        o_ref, emb_ref, *, bn_eps):
    @pl.when(pl.program_id(0) == 0)
    def _():
        xin = jnp.maximum(pool_ref[...], 0.0).astype(MXU_DTYPE)   # fc ReLU
        x = jnp.dot(xin, w_ref[...], preferred_element_type=jnp.float32)
        x = jnp.maximum(x + b_ref[...], 0.0)                      # bias + ReLU
        # BatchNorm1d, training-mode batch statistics (biased var), f32 math.
        # NOTE: with B == 1 the batch variance is 0 (PyTorch training mode
        # would raise); padded feature lanes are all-zero and stay zero.
        mean = jnp.mean(x, axis=0, keepdims=True)
        d = x - mean
        var = jnp.mean(d * d, axis=0, keepdims=True)
        x = d * jax.lax.rsqrt(var + bn_eps)
        x = x * g_ref[...] + be_ref[...]
        # L2 normalize (padded lanes contribute zero).
        inv = jax.lax.rsqrt(jnp.sum(x * x, axis=1, keepdims=True) + 1e-12)
        emb_ref[...] = (x * inv).astype(MXU_DTYPE)

    # s * cos(theta): contract the feature dims directly (no transpose).
    o_ref[...] = jax.lax.dot_general(
        emb_ref[...], cls_ref[...],
        dimension_numbers=(((1,), (1,)), ((), ())),
        preferred_element_type=jnp.float32)


def embed_cosine(pooled, arrays, cfg):
    B, PC, Fp = cfg["B"], cfg["PC"], cfg["Fp"]
    Kp, tile_k, K = cfg["Kp"], cfg["tile_k"], cfg["K"]
    n_tiles = Kp // tile_k

    cls_kwargs = {}
    if n_tiles >= 3:
        # Deeper pipeline on the streamed (HBM-bound) class-weight tiles.
        cls_kwargs["pipeline_mode"] = pl.Buffered(3)

    kern = functools.partial(embed_cosine_kernel, bn_eps=cfg["bn_eps"])
    logits = pl.pallas_call(
        kern,
        out_shape=jax.ShapeDtypeStruct((B, Kp), jnp.float32),
        grid=(n_tiles,),
        in_specs=[
            pl.BlockSpec((B, PC), lambda j: (0, 0)),          # resident
            pl.BlockSpec((PC, Fp), lambda j: (0, 0)),         # resident
            pl.BlockSpec((1, Fp), lambda j: (0, 0)),
            pl.BlockSpec((1, Fp), lambda j: (0, 0)),
            pl.BlockSpec((1, Fp), lambda j: (0, 0)),
            pl.BlockSpec((tile_k, Fp), lambda j: (j, 0), **cls_kwargs),
        ],
        out_specs=pl.BlockSpec((B, tile_k), lambda j: (0, j)),
        scratch_shapes=[pltpu.VMEM((B, Fp), MXU_DTYPE)],
        compiler_params=pltpu.CompilerParams(
            # Must be "arbitrary": the program_id==0 prologue fills the emb
            # scratch reused by later class tiles (cannot shard across cores).
            dimension_semantics=("arbitrary",),
            vmem_limit_bytes=VMEM_LIMIT),
        cost_estimate=pl.CostEstimate(
            flops=2 * B * PC * Fp + 2 * B * Kp * Fp,
            transcendentals=2 * B * Fp,
            bytes_accessed=(B * PC + 3 * Fp + B * Kp) * 4
                           + (PC * Fp + Kp * Fp) * 2),
    )(pooled, arrays["fc_w"], arrays["fc_b"], arrays["bn_gamma"],
      arrays["bn_beta"], arrays["cls_w"])
    return logits[:, :K]


# ----------------------------------------------------------------------------
# Full forward (label=None path).
# ----------------------------------------------------------------------------
def xxxface_forward(x, arrays, cfg):
    pooled = conv3x3_relu_concat_pool(x, arrays, cfg)
    return embed_cosine(pooled, arrays, cfg)


def xavier_normal(key, shape, fan_in, fan_out):
    std = math.sqrt(2.0 / (fan_in + fan_out))
    return std * jax.random.normal(key, shape, dtype=jnp.float32)


if __name__ == "__main__":
    B, Cin, H, W = 2, 4, 16, 16
    Cenc = 8
    num_features = 32
    num_classes = 200

    key = jax.random.PRNGKey(0)
    k_x, k_cw, k_cb, k_fw, k_pw = jax.random.split(key, 5)

    x = jax.random.normal(k_x, (B, Cin, H, W), dtype=jnp.float32)

    params = {
        # encoder conv: xavier-normal weight, small deterministic bias
        "conv_w": xavier_normal(k_cw, (Cenc, Cin, 3, 3),
                                fan_in=Cin * 9, fan_out=Cenc * 9),
        "conv_b": 0.01 * jax.random.normal(k_cb, (Cenc,), dtype=jnp.float32),
        # fc Linear(2*Cenc -> num_features): xavier-normal weight, zero bias
        "fc_w": xavier_normal(k_fw, (num_features, 2 * Cenc),
                              fan_in=2 * Cenc, fan_out=num_features),
        "fc_b": jnp.zeros((num_features,), dtype=jnp.float32),
        # BatchNorm1d: weight=1, bias=0 (per _init_module_params)
        "bn_gamma": jnp.ones((num_features,), dtype=jnp.float32),
        "bn_beta": jnp.zeros((num_features,), dtype=jnp.float32),
        # xface product class weights
        "prod_w": xavier_normal(k_pw, (num_classes, num_features),
                                fan_in=num_features, fan_out=num_classes),
    }

    # One-time weight preprocessing (hoisted out of the per-call forward).
    arrays, cfg = prepare_params(params, x.shape, scale=30.0)

    fwd = jax.jit(functools.partial(xxxface_forward, cfg=cfg))
    out = jax.block_until_ready(fwd(x, arrays))

    assert out.shape == (B, num_classes), out.shape
    assert bool(jnp.all(jnp.isfinite(out)))
    print("KERNEL_OK")
</pallas_src>

<mosaic_0001>
module attributes {stable_mosaic.version = 11 : i64} {
  func.func @conv_pool_kernel(%arg0: i32, %arg1: memref<4x512xf32, #tpu.memory_space<vmem>>, %arg2: memref<48x128xbf16, #tpu.memory_space<vmem>>, %arg3: memref<1x128xf32, #tpu.memory_space<vmem>>, %arg4: memref<9x512xf32, #tpu.memory_space<vmem>>, %arg5: memref<1x2x256xf32, #tpu.memory_space<vmem>>, %arg6: memref<48x512xbf16, #tpu.memory_space<vmem>>) attributes {dimension_semantics = [#tpu.dimension_semantics<parallel>], iteration_bounds = array<i64: 1>, scalar_prefetch = 0 : i64, scratch_operands = 1 : i64, tpu.core_type = #tpu.core_type<tc>, window_params = [{transform_indices = @transform_0, window_bounds = array<i64: 4, 512>}, {pipeline_mode = #tpu.pipeline_mode<synchronous>, transform_indices = @transform_1, window_bounds = array<i64: 48, 128>}, {pipeline_mode = #tpu.pipeline_mode<synchronous>, transform_indices = @transform_2, window_bounds = array<i64: 1, 128>}, {pipeline_mode = #tpu.pipeline_mode<synchronous>, transform_indices = @transform_3, window_bounds = array<i64: 9, 512>}, {transform_indices = @transform_4, window_bounds = array<i64: 1, 2, 256>}]} {
    %c0 = arith.constant 0 : index
    %c0_0 = arith.constant 0 : index
    %0 = vector.load %arg1[%c0, %c0_0] : memref<4x512xf32, #tpu.memory_space<vmem>>, vector<4x512xf32>
    %c0_1 = arith.constant 0 : index
    %c0_2 = arith.constant 0 : index
    %1 = vector.load %arg4[%c0_1, %c0_2] : memref<9x512xf32, #tpu.memory_space<vmem>>, vector<9x512xf32>
    %cst = arith.constant 0.000000e+00 : bf16
    %2 = vector.broadcast %cst : bf16 to vector<12x512xbf16>
    %c36 = arith.constant 36 : index
    %c0_3 = arith.constant 0 : index
    %3 = vector.load %arg6[%c36, %c0_3] : memref<48x512xbf16, #tpu.memory_space<vmem>>, vector<12x512xbf16>
    tpu.vector_store %arg6[%c36, %c0_3], %2 {strides = array<i32>} : memref<48x512xbf16, #tpu.memory_space<vmem>>, vector<12x512xbf16>,
    %c17_i32 = arith.constant 17 : i32
    %4 = tpu.dynamic_rotate %0 by %c17_i32 dim 1 : vector<4x512xf32>, i32 -> vector<4x512xf32>
    %5 = vector.extract_strided_slice %1 {offsets = [0, 0], sizes = [1, 512], strides = [1, 1]} : vector<9x512xf32> to vector<1x512xf32>
    %6 = vector.broadcast %5 : vector<1x512xf32> to vector<4x512xf32>
    %7 = arith.mulf %4, %6 : vector<4x512xf32>
    %8 = arith.truncf %7 : vector<4x512xf32> to vector<4x512xbf16>
    %c0_4 = arith.constant 0 : index
    %c0_5 = arith.constant 0 : index
    %9 = vector.load %arg6[%c0_4, %c0_5] : memref<48x512xbf16, #tpu.memory_space<vmem>>, vector<4x512xbf16>
    tpu.vector_store %arg6[%c0_4, %c0_5], %8 {strides = array<i32>} : memref<48x512xbf16, #tpu.memory_space<vmem>>, vector<4x512xbf16>,
    %c16_i32 = arith.constant 16 : i32
    %10 = tpu.dynamic_rotate %0 by %c16_i32 dim 1 : vector<4x512xf32>, i32 -> vector<4x512xf32>
    %11 = vector.extract_strided_slice %1 {offsets = [1, 0], sizes = [1, 512], strides = [1, 1]} : vector<9x512xf32> to vector<1x512xf32>
    %12 = vector.broadcast %11 : vector<1x512xf32> to vector<4x512xf32>
    %13 = arith.mulf %10, %12 : vector<4x512xf32>
    %14 = arith.truncf %13 : vector<4x512xf32> to vector<4x512xbf16>
    %c4 = arith.constant 4 : index
    %c0_6 = arith.constant 0 : index
    %15 = vector.load %arg6[%c4, %c0_6] : memref<48x512xbf16, #tpu.memory_space<vmem>>, vector<4x512xbf16>
    tpu.vector_store %arg6[%c4, %c0_6], %14 {strides = array<i32>} : memref<48x512xbf16, #tpu.memory_space<vmem>>, vector<4x512xbf16>,
    %c15_i32 = arith.constant 15 : i32
    %16 = tpu.dynamic_rotate %0 by %c15_i32 dim 1 : vector<4x512xf32>, i32 -> vector<4x512xf32>
    %17 = vector.extract_strided_slice %1 {offsets = [2, 0], sizes = [1, 512], strides = [1, 1]} : vector<9x512xf32> to vector<1x512xf32>
    %18 = vector.broadcast %17 : vector<1x512xf32> to vector<4x512xf32>
    %19 = arith.mulf %16, %18 : vector<4x512xf32>
    %20 = arith.truncf %19 : vector<4x512xf32> to vector<4x512xbf16>
    %c8 = arith.constant 8 : index
    %c0_7 = arith.constant 0 : index
    %21 = vector.load %arg6[%c8, %c0_7] : memref<48x512xbf16, #tpu.memory_space<vmem>>, vector<4x512xbf16>
    tpu.vector_store %arg6[%c8, %c0_7], %20 {strides = array<i32>} : memref<48x512xbf16, #tpu.memory_space<vmem>>, vector<4x512xbf16>,
    %c1_i32 = arith.constant 1 : i32
    %22 = tpu.dynamic_rotate %0 by %c1_i32 dim 1 : vector<4x512xf32>, i32 -> vector<4x512xf32>
    %23 = vector.extract_strided_slice %1 {offsets = [3, 0], sizes = [1, 512], strides = [1, 1]} : vector<9x512xf32> to vector<1x512xf32>
    %24 = vector.broadcast %23 : vector<1x512xf32> to vector<4x512xf32>
    %25 = arith.mulf %22, %24 : vector<4x512xf32>
    %26 = arith.truncf %25 : vector<4x512xf32> to vector<4x512xbf16>
    %c12 = arith.constant 12 : index
    %c0_8 = arith.constant 0 : index
    %27 = vector.load %arg6[%c12, %c0_8] : memref<48x512xbf16, #tpu.memory_space<vmem>>, vector<4x512xbf16>
    tpu.vector_store %arg6[%c12, %c0_8], %26 {strides = array<i32>} : memref<48x512xbf16, #tpu.memory_space<vmem>>, vector<4x512xbf16>,
    %28 = arith.truncf %0 : vector<4x512xf32> to vector<4x512xbf16>
    %c16 = arith.constant 16 : index
    %c0_9 = arith.constant 0 : index
    %29 = vector.load %arg6[%c16, %c0_9] : memref<48x512xbf16, #tpu.memory_space<vmem>>, vector<4x512xbf16>
    tpu.vector_store %arg6[%c16, %c0_9], %28 {strides = array<i32>} : memref<48x512xbf16, #tpu.memory_space<vmem>>, vector<4x512xbf16>,
    %c511_i32 = arith.constant 511 : i32
    %30 = tpu.dynamic_rotate %0 by %c511_i32 dim 1 : vector<4x512xf32>, i32 -> vector<4x512xf32>
    %31 = vector.extract_strided_slice %1 {offsets = [5, 0], sizes = [1, 512], strides = [1, 1]} : vector<9x512xf32> to vector<1x512xf32>
    %32 = vector.broadcast %31 : vector<1x512xf32> to vector<4x512xf32>
    %33 = arith.mulf %30, %32 : vector<4x512xf32>
    %34 = arith.truncf %33 : vector<4x512xf32> to vector<4x512xbf16>
    %c20 = arith.constant 20 : index
    %c0_10 = arith.constant 0 : index
    %35 = vector.load %arg6[%c20, %c0_10] : memref<48x512xbf16, #tpu.memory_space<vmem>>, vector<4x512xbf16>
    tpu.vector_store %arg6[%c20, %c0_10], %34 {strides = array<i32>} : memref<48x512xbf16, #tpu.memory_space<vmem>>, vector<4x512xbf16>,
    %c497_i32 = arith.constant 497 : i32
    %36 = tpu.dynamic_rotate %0 by %c497_i32 dim 1 : vector<4x512xf32>, i32 -> vector<4x512xf32>
    %37 = vector.extract_strided_slice %1 {offsets = [6, 0], sizes = [1, 512], strides = [1, 1]} : vector<9x512xf32> to vector<1x512xf32>
    %38 = vector.broadcast %37 : vector<1x512xf32> to vector<4x512xf32>
    %39 = arith.mulf %36, %38 : vector<4x512xf32>
    %40 = arith.truncf %39 : vector<4x512xf32> to vector<4x512xbf16>
    %c24 = arith.constant 24 : index
    %c0_11 = arith.constant 0 : index
    %41 = vector.load %arg6[%c24, %c0_11] : memref<48x512xbf16, #tpu.memory_space<vmem>>, vector<4x512xbf16>
    tpu.vector_store %arg6[%c24, %c0_11], %40 {strides = array<i32>} : memref<48x512xbf16, #tpu.memory_space<vmem>>, vector<4x512xbf16>,
    %c496_i32 = arith.constant 496 : i32
    %42 = tpu.dynamic_rotate %0 by %c496_i32 dim 1 : vector<4x512xf32>, i32 -> vector<4x512xf32>
    %43 = vector.extract_strided_slice %1 {offsets = [7, 0], sizes = [1, 512], strides = [1, 1]} : vector<9x512xf32> to vector<1x512xf32>
    %44 = vector.broadcast %43 : vector<1x512xf32> to vector<4x512xf32>
    %45 = arith.mulf %42, %44 : vector<4x512xf32>
    %46 = arith.truncf %45 : vector<4x512xf32> to vector<4x512xbf16>
    %c28 = arith.constant 28 : index
    %c0_12 = arith.constant 0 : index
    %47 = vector.load %arg6[%c28, %c0_12] : memref<48x512xbf16, #tpu.memory_space<vmem>>, vector<4x512xbf16>
    tpu.vector_store %arg6[%c28, %c0_12], %46 {strides = array<i32>} : memref<48x512xbf16, #tpu.memory_space<vmem>>, vector<4x512xbf16>,
    %c495_i32 = arith.constant 495 : i32
    %48 = tpu.dynamic_rotate %0 by %c495_i32 dim 1 : vector<4x512xf32>, i32 -> vector<4x512xf32>
    %49 = vector.extract_strided_slice %1 {offsets = [8, 0], sizes = [1, 512], strides = [1, 1]} : vector<9x512xf32> to vector<1x512xf32>
    %50 = vector.broadcast %49 : vector<1x512xf32> to vector<4x512xf32>
    %51 = arith.mulf %48, %50 : vector<4x512xf32>
    %52 = arith.truncf %51 : vector<4x512xf32> to vector<4x512xbf16>
    %c32 = arith.constant 32 : index
    %c0_13 = arith.constant 0 : index
    %53 = vector.load %arg6[%c32, %c0_13] : memref<48x512xbf16, #tpu.memory_space<vmem>>, vector<4x512xbf16>
    tpu.vector_store %arg6[%c32, %c0_13], %52 {strides = array<i32>} : memref<48x512xbf16, #tpu.memory_space<vmem>>, vector<4x512xbf16>,
    %c0_14 = arith.constant 0 : index
    %c0_15 = arith.constant 0 : index
    %54 = vector.load %arg6[%c0_14, %c0_15] : memref<48x512xbf16, #tpu.memory_space<vmem>>, vector<48x512xbf16>
    %c0_16 = arith.constant 0 : index
    %c0_17 = arith.constant 0 : index
    %55 = vector.load %arg2[%c0_16, %c0_17] : memref<48x128xbf16, #tpu.memory_space<vmem>>, vector<48x128xbf16>
    %cst_18 = arith.constant dense<0.000000e+00> : vector<512x128xf32>
    %56 = tpu.matmul %54, %55, %cst_18 {dimension_numbers = #tpu.dot_dimension_numbers<[0], [0], [1], [1], [0, 1, 1, 1], [], []>} : vector<48x512xbf16>, vector<48x128xbf16>, vector<512x128xf32> -> vector<512x128xf32>
    %c0_19 = arith.constant 0 : index
    %c0_20 = arith.constant 0 : index
    %57 = vector.load %arg3[%c0_19, %c0_20] : memref<1x128xf32, #tpu.memory_space<vmem>>, vector<1x128xf32>
    %58 = vector.broadcast %57 : vector<1x128xf32> to vector<512x128xf32>
    %59 = arith.addf %56, %58 : vector<512x128xf32>
    %cst_21 = arith.constant 0.000000e+00 : f32
    %60 = vector.broadcast %cst_21 : f32 to vector<512x128xf32>
    %61 = arith.maximumf %59, %60 : vector<512x128xf32>
    %62 = vector.shape_cast %61 : vector<512x128xf32> to vector<2x256x128xf32>
    %cst_22 = arith.constant dense<0xFF800000> : vector<2x128xf32>
    %63 = vector.multi_reduction <maximumf>, %62, %cst_22 [1] : vector<2x256x128xf32> to vector<2x128xf32>
    %cst_23 = arith.constant dense<0.000000e+00> : vector<2x128xf32>
    %64 = vector.multi_reduction <add>, %62, %cst_23 [1] : vector<2x256x128xf32> to vector<2x128xf32>
    %cst_24 = arith.constant 3.906250e-03 : f32
    %65 = vector.broadcast %cst_24 : f32 to vector<2x128xf32>
    %66 = arith.mulf %64, %65 : vector<2x128xf32>
    %67 = tpu.concatenate %63, %66 in 1 : vector<2x128xf32>, vector<2x128xf32> -> vector<2x256xf32>
    %c0_25 = arith.constant 0 : index
    %c0_26 = arith.constant 0 : index
    %c0_27 = arith.constant 0 : index
    %68 = vector.load %arg5[%c0_25, %c0_26, %c0_27] : memref<1x2x256xf32, #tpu.memory_space<vmem>>, vector<1x2x256xf32>
    %69 = vector.shape_cast %68 : vector<1x2x256xf32> to vector<2x256xf32>
    %70 = vector.shape_cast %67 : vector<2x256xf32> to vector<1x2x256xf32>
    tpu.vector_store %arg5[%c0_25, %c0_26, %c0_27], %70 {strides = array<i32>} : memref<1x2x256xf32, #tpu.memory_space<vmem>>, vector<1x2x256xf32>,
    return
  }
  func.func @transform_0(%arg0: i32) -> (i32, i32) {
    %c0_i32 = arith.constant 0 : i32
    %c0_i32_0 = arith.constant 0 : i32
    return %c0_i32, %arg0 : i32, i32
  }
  func.func @transform_1(%arg0: i32) -> (i32, i32) {
    %c0_i32 = arith.constant 0 : i32
    %c0_i32_0 = arith.constant 0 : i32
    %c0_i32_1 = arith.constant 0 : i32
    return %c0_i32, %c0_i32_0 : i32, i32
  }
  func.func @transform_2(%arg0: i32) -> (i32, i32) {
    %c0_i32 = arith.constant 0 : i32
    %c0_i32_0 = arith.constant 0 : i32
    %c0_i32_1 = arith.constant 0 : i32
    return %c0_i32, %c0_i32_0 : i32, i32
  }
  func.func @transform_3(%arg0: i32) -> (i32, i32) {
    %c0_i32 = arith.constant 0 : i32
    %c0_i32_0 = arith.constant 0 : i32
    %c0_i32_1 = arith.constant 0 : i32
    return %c0_i32, %c0_i32_0 : i32, i32
  }
  func.func @transform_4(%arg0: i32) -> (i32, i32, i32) {
    %c0_i32 = arith.constant 0 : i32
    %c0_i32_0 = arith.constant 0 : i32
    %c0_i32_1 = arith.constant 0 : i32
    return %arg0, %c0_i32, %c0_i32_0 : i32, i32, i32
  }
}

module attributes {stable_mosaic.version = 11 : i64} {
  func.func @embed_cosine_kernel(%arg0: i32, %arg1: memref<2x256xf32, #tpu.memory_space<vmem>>, %arg2: memref<256x128xbf16, #tpu.memory_space<vmem>>, %arg3: memref<1x128xf32, #tpu.memory_space<vmem>>, %arg4: memref<1x128xf32, #tpu.memory_space<vmem>>, %arg5: memref<1x128xf32, #tpu.memory_space<vmem>>, %arg6: memref<256x128xbf16, #tpu.memory_space<vmem>>, %arg7: memref<2x256xf32, #tpu.memory_space<vmem>>, %arg8: memref<2x128xbf16, #tpu.memory_space<vmem>>) attributes {dimension_semantics = [#tpu.dimension_semantics<arbitrary>], iteration_bounds = array<i64: 1>, scalar_prefetch = 0 : i64, scratch_operands = 1 : i64, tpu.core_type = #tpu.core_type<tc>, window_params = [{pipeline_mode = #tpu.pipeline_mode<synchronous>, transform_indices = @transform_0, window_bounds = array<i64: 2, 256>}, {pipeline_mode = #tpu.pipeline_mode<synchronous>, transform_indices = @transform_1, window_bounds = array<i64: 256, 128>}, {pipeline_mode = #tpu.pipeline_mode<synchronous>, transform_indices = @transform_2, window_bounds = array<i64: 1, 128>}, {pipeline_mode = #tpu.pipeline_mode<synchronous>, transform_indices = @transform_3, window_bounds = array<i64: 1, 128>}, {pipeline_mode = #tpu.pipeline_mode<synchronous>, transform_indices = @transform_4, window_bounds = array<i64: 1, 128>}, {transform_indices = @transform_5, window_bounds = array<i64: 256, 128>}, {transform_indices = @transform_6, window_bounds = array<i64: 2, 256>}]} {
    %c0_i32 = arith.constant 0 : i32
    %0 = arith.cmpi eq, %arg0, %c0_i32 : i32
    %1 = arith.extui %0 : i1 to i32
    %c0_i32_0 = arith.constant 0 : i32
    %2 = arith.cmpi ne, %1, %c0_i32_0 : i32
    scf.if %2 {
      %c0_6 = arith.constant 0 : index
      %c0_7 = arith.constant 0 : index
      %7 = vector.load %arg1[%c0_6, %c0_7] : memref<2x256xf32, #tpu.memory_space<vmem>>, vector<2x256xf32>
      %cst_8 = arith.constant 0.000000e+00 : f32
      %8 = vector.broadcast %cst_8 : f32 to vector<2x256xf32>
      %9 = arith.maximumf %7, %8 : vector<2x256xf32>
      %10 = arith.truncf %9 : vector<2x256xf32> to vector<2x256xbf16>
      %c0_9 = arith.constant 0 : index
      %c0_10 = arith.constant 0 : index
      %11 = vector.load %arg2[%c0_9, %c0_10] : memref<256x128xbf16, #tpu.memory_space<vmem>>, vector<256x128xbf16>
      %cst_11 = arith.constant dense<0.000000e+00> : vector<2x128xf32>
      %12 = tpu.matmul %10, %11, %cst_11 {dimension_numbers = #tpu.dot_dimension_numbers<[1], [0], [0], [1], [0, 0, 1, 1], [], []>} : vector<2x256xbf16>, vector<256x128xbf16>, vector<2x128xf32> -> vector<2x128xf32>
      %c0_12 = arith.constant 0 : index
      %c0_13 = arith.constant 0 : index
      %13 = vector.load %arg3[%c0_12, %c0_13] : memref<1x128xf32, #tpu.memory_space<vmem>>, vector<1x128xf32>
      %14 = vector.broadcast %13 : vector<1x128xf32> to vector<2x128xf32>
      %15 = arith.addf %12, %14 : vector<2x128xf32>
      %cst_14 = arith.constant 0.000000e+00 : f32
      %16 = vector.broadcast %cst_14 : f32 to vector<2x128xf32>
      %17 = arith.maximumf %15, %16 : vector<2x128xf32>
      %cst_15 = arith.constant dense<0.000000e+00> : vector<128xf32>
      %18 = vector.multi_reduction <add>, %17, %cst_15 [0] : vector<2x128xf32> to vector<128xf32>
      %19 = vector.shape_cast %18 : vector<128xf32> to vector<1x128xf32>
      %cst_16 = arith.constant 2.000000e+00 : f32
      %20 = vector.broadcast %cst_16 : f32 to vector<1x128xf32>
      %21 = arith.divf %19, %20 : vector<1x128xf32>
      %22 = vector.broadcast %21 : vector<1x128xf32> to vector<2x128xf32>
      %23 = arith.subf %17, %22 : vector<2x128xf32>
      %24 = arith.mulf %23, %23 : vector<2x128xf32>
      %cst_17 = arith.constant dense<0.000000e+00> : vector<128xf32>
      %25 = vector.multi_reduction <add>, %24, %cst_17 [0] : vector<2x128xf32> to vector<128xf32>
      %26 = vector.shape_cast %25 : vector<128xf32> to vector<1x128xf32>
      %cst_18 = arith.constant 2.000000e+00 : f32
      %27 = vector.broadcast %cst_18 : f32 to vector<1x128xf32>
      %28 = arith.divf %26, %27 : vector<1x128xf32>
      %cst_19 = arith.constant 9.99999974E-6 : f32
      %29 = vector.broadcast %cst_19 : f32 to vector<1x128xf32>
      %30 = arith.addf %28, %29 : vector<1x128xf32>
      %31 = math.rsqrt %30 : vector<1x128xf32>
      %32 = vector.broadcast %31 : vector<1x128xf32> to vector<2x128xf32>
      %33 = arith.mulf %23, %32 : vector<2x128xf32>
      %c0_20 = arith.constant 0 : index
      %c0_21 = arith.constant 0 : index
      %34 = vector.load %arg4[%c0_20, %c0_21] : memref<1x128xf32, #tpu.memory_space<vmem>>, vector<1x128xf32>
      %35 = vector.broadcast %34 : vector<1x128xf32> to vector<2x128xf32>
      %36 = arith.mulf %33, %35 : vector<2x128xf32>
      %c0_22 = arith.constant 0 : index
      %c0_23 = arith.constant 0 : index
      %37 = vector.load %arg5[%c0_22, %c0_23] : memref<1x128xf32, #tpu.memory_space<vmem>>, vector<1x128xf32>
      %38 = vector.broadcast %37 : vector<1x128xf32> to vector<2x128xf32>
      %39 = arith.addf %36, %38 : vector<2x128xf32>
      %40 = arith.mulf %39, %39 : vector<2x128xf32>
      %cst_24 = arith.constant dense<0.000000e+00> : vector<2xf32>
      %41 = vector.multi_reduction <add>, %40, %cst_24 [1] : vector<2x128xf32> to vector<2xf32>
      %42 = vector.shape_cast %41 : vector<2xf32> to vector<2x1xf32>
      %cst_25 = arith.constant 9.99999996E-13 : f32
      %43 = vector.broadcast %cst_25 : f32 to vector<2x1xf32>
      %44 = arith.addf %42, %43 : vector<2x1xf32>
      %45 = math.rsqrt %44 : vector<2x1xf32>
      %46 = vector.broadcast %45 : vector<2x1xf32> to vector<2x128xf32>
      %47 = arith.mulf %39, %46 : vector<2x128xf32>
      %48 = arith.truncf %47 : vector<2x128xf32> to vector<2x128xbf16>
      %c0_26 = arith.constant 0 : index
      %c0_27 = arith.constant 0 : index
      %49 = vector.load %arg8[%c0_26, %c0_27] : memref<2x128xbf16, #tpu.memory_space<vmem>>, vector<2x128xbf16>
      tpu.vector_store %arg8[%c0_26, %c0_27], %48 {strides = array<i32>} : memref<2x128xbf16, #tpu.memory_space<vmem>>, vector<2x128xbf16>,
    } else {
    }
    %c0 = arith.constant 0 : index
    %c0_1 = arith.constant 0 : index
    %3 = vector.load %arg8[%c0, %c0_1] : memref<2x128xbf16, #tpu.memory_space<vmem>>, vector<2x128xbf16>
    %c0_2 = arith.constant 0 : index
    %c0_3 = arith.constant 0 : index
    %4 = vector.load %arg6[%c0_2, %c0_3] : memref<256x128xbf16, #tpu.memory_space<vmem>>, vector<256x128xbf16>
    %cst = arith.constant dense<0.000000e+00> : vector<2x256xf32>
    %5 = tpu.matmul %3, %4, %cst {dimension_numbers = #tpu.dot_dimension_numbers<[1], [1], [0], [0], [0, 0, 1, 0], [], []>} : vector<2x128xbf16>, vector<256x128xbf16>, vector<2x256xf32> -> vector<2x256xf32>
    %c0_4 = arith.constant 0 : index
    %c0_5 = arith.constant 0 : index
    %6 = vector.load %arg7[%c0_4, %c0_5] : memref<2x256xf32, #tpu.memory_space<vmem>>, vector<2x256xf32>
    tpu.vector_store %arg7[%c0_4, %c0_5], %5 {strides = array<i32>} : memref<2x256xf32, #tpu.memory_space<vmem>>, vector<2x256xf32>,
    return
  }
  func.func @transform_0(%arg0: i32) -> (i32, i32) {
    %c0_i32 = arith.constant 0 : i32
    %c0_i32_0 = arith.constant 0 : i32
    %c0_i32_1 = arith.constant 0 : i32
    return %c0_i32, %c0_i32_0 : i32, i32
  }
  func.func @transform_1(%arg0: i32) -> (i32, i32) {
    %c0_i32 = arith.constant 0 : i32
    %c0_i32_0 = arith.constant 0 : i32
    %c0_i32_1 = arith.constant 0 : i32
    return %c0_i32, %c0_i32_0 : i32, i32
  }
  func.func @transform_2(%arg0: i32) -> (i32, i32) {
    %c0_i32 = arith.constant 0 : i32
    %c0_i32_0 = arith.constant 0 : i32
    %c0_i32_1 = arith.constant 0 : i32
    return %c0_i32, %c0_i32_0 : i32, i32
  }
  func.func @transform_3(%arg0: i32) -> (i32, i32) {
    %c0_i32 = arith.constant 0 : i32
    %c0_i32_0 = arith.constant 0 : i32
    %c0_i32_1 = arith.constant 0 : i32
    return %c0_i32, %c0_i32_0 : i32, i32
  }
  func.func @transform_4(%arg0: i32) -> (i32, i32) {
    %c0_i32 = arith.constant 0 : i32
    %c0_i32_0 = arith.constant 0 : i32
    %c0_i32_1 = arith.constant 0 : i32
    return %c0_i32, %c0_i32_0 : i32, i32
  }
  func.func @transform_5(%arg0: i32) -> (i32, i32) {
    %c0_i32 = arith.constant 0 : i32
    %c0_i32_0 = arith.constant 0 : i32
    return %arg0, %c0_i32 : i32, i32
  }
  func.func @transform_6(%arg0: i32) -> (i32, i32) {
    %c0_i32 = arith.constant 0 : i32
    %c0_i32_0 = arith.constant 0 : i32
    return %c0_i32, %arg0 : i32, i32
  }
}

</mosaic_0001>

<llo_original>
// kernel: xxxface_forward.3
$region0: #{xxxface_forward.3}
  #allocation0 [shape = 'u32[]', space=smem, size = 0x4, offset = 0x4, fixed_abs, tag = 'smem constant byte address 0x4 - core index']
  #allocation1 [shape = 'u32[144,128]{1,0:T(1,128)}', space=vmem, size = 0x12000, scoped, tag = 'internal scratch']
  #allocation2 [shape = 'bf16[2,128]{1,0:T(2,128)(2,1)}', space=vmem, size = 0x200, scoped, tag = 'scratch operand']
  %s0 = inlined_call_operand.vmem [shape: f32[2,256], index: 0, kind: input, shape index: {}]
  %s1 = inlined_call_operand.vmem [shape: bf16[256,128], index: 1, kind: input, shape index: {}]
  %s2 = inlined_call_operand.vmem [shape: f32[1,128], index: 2, kind: input, shape index: {}]
  %s3 = inlined_call_operand.vmem [shape: f32[1,128], index: 3, kind: input, shape index: {}]
  %s4 = inlined_call_operand.vmem [shape: f32[1,128], index: 4, kind: input, shape index: {}]
  %s5 = inlined_call_operand.vmem [shape: bf16[256,128], index: 5, kind: input, shape index: {}]
  %s6 = inlined_call_operand.hbm [shape: f32[2,256], index: 6, kind: output, shape index: {}]
  %s7 = sld [smem:[#allocation0]]
  $region38: #{xxxface_forward.3} parent=0
    _
  %s9 = ssub.s32 1, %s7
  %s10 = scalar_select 0, %s9, %s7
  $region1: #{xxxface_forward.3} parent=0
    #allocation3 [shape = 'u8[2048]{0}', space=vmem, size = 0x800, scoped, tag = 'output window, operand 0, single buffered']
    #allocation4 [shape = 's32[1]{0}', space=sflag, size = 0x4, scoped, tag = 'scoped memory for xxxface_forward.3']
    %11 = vsyncpa [#allocation4], 0
    // Predicated region
    $region2: #{xxxface_forward.3} parent=1 // pred_check
      _
    $region3: #{xxxface_forward.3} parent=1 // pred_check_branch
      %13 = sbr.rel (0) target = $region5
    $region4: #{xxxface_forward.3} parent=1 // pred_region
      _
    $region5: #{xxxface_forward.3} parent=1 // pred_fallthru
      _
    // Predicated region
    $region6: #{xxxface_forward.3} parent=1 // pred_check
      _
    $region7: #{xxxface_forward.3} parent=1 // pred_check_branch
      %15 = sbr.rel (0) target = $region9
    $region8: #{xxxface_forward.3} parent=1 // pred_region
      _
    $region9: #{xxxface_forward.3} parent=1 // pred_fallthru
      _
    // Predicated region
    $region10: #{xxxface_forward.3} parent=1 // pred_check
      _
    $region11: #{xxxface_forward.3} parent=1 // pred_check_branch
      %17 = sbr.rel (0) target = $region13
    $region12: #{xxxface_forward.3} parent=1 // pred_region
      _
    $region13: #{xxxface_forward.3} parent=1 // pred_fallthru
      _
    // Predicated region
    $region14: #{xxxface_forward.3} parent=1 // pred_check
      _
    $region15: #{xxxface_forward.3} parent=1 // pred_check_branch
      %19 = sbr.rel (0) target = $region17
    $region16: #{xxxface_forward.3} parent=1 // pred_region
      _
    $region17: #{xxxface_forward.3} parent=1 // pred_fallthru
      _
    // Predicated region
    $region18: #{xxxface_forward.3} parent=1 // pred_check
      _
    $region19: #{xxxface_forward.3} parent=1 // pred_check_branch
      %21 = sbr.rel (0) target = $region21
    $region20: #{xxxface_forward.3} parent=1 // pred_region
      _
    $region21: #{xxxface_forward.3} parent=1 // pred_fallthru
      _
    // Predicated region
    $region22: #{xxxface_forward.3} parent=1 // pred_check
      _
    $region23: #{xxxface_forward.3} parent=1 // pred_check_branch
      %23 = sbr.rel (0) target = $region25
    $region24: #{xxxface_forward.3} parent=1 // pred_region
      _
    $region25: #{xxxface_forward.3} parent=1 // pred_fallthru
      _
    %p25 = scmp.eq.s32.totalorder 0, 0
    // Predicated region
    $region26: #{xxxface_forward.3} parent=1 // pred_check
      %p26 = pneg %p25
    $region27: #{xxxface_forward.3} parent=1 // pred_check_branch
      %28 = sbr.rel (%p26) target = $region29
    $region28: #{xxxface_forward.3} parent=1 // pred_region
      %v29 = vld [vmem:[%s0] sm:$0xf]
      %v30 = vmax.f32 %v29, 0.0
      %v33 = vunpack.c.l.s4 1983009808
      %v34 = vunpack.c.0.s8 %v33
      %v35 = vlaneseq
      %v36 = vshrl.u32 %v35, 7
      %v37 = vsub.s32 %v34, %v36
      %v38 = vrot.slane %v30, %v37
      %v39 = vcombine.high %v38, %v38
      %v42 = vpack.c.bf16 %v38, %v38
      %v43 = vpack.c.bf16 %v39, %v39
      %v44 = vld [vmem:[%s1] sm:$0xf]
      %v45 = vld [vmem:[%s1 + $0x4] sm:$0xf]
      %v46 = vld [vmem:[%s1 + $0x8] sm:$0xf]
      %v47 = vld [vmem:[%s1 + $0xc] sm:$0xf]
      %v48 = vld [vmem:[%s1 + $0x10] sm:$0xf]
      %v49 = vld [vmem:[%s1 + $0x14] sm:$0xf]
      %v50 = vld [vmem:[%s1 + $0x18] sm:$0xf]
      %v51 = vld [vmem:[%s1 + $0x1c] sm:$0xf]
      %v52 = vld [vmem:[%s1 + $0x20] sm:$0xf]
      %v53 = vld [vmem:[%s1 + $0x24] sm:$0xf]
      %v54 = vld [vmem:[%s1 + $0x28] sm:$0xf]
      %v55 = vld [vmem:[%s1 + $0x2c] sm:$0xf]
      %v56 = vld [vmem:[%s1 + $0x30] sm:$0xf]
      %v57 = vld [vmem:[%s1 + $0x34] sm:$0xf]
      %v58 = vld [vmem:[%s1 + $0x38] sm:$0xf]
      %v59 = vld [vmem:[%s1 + $0x3c] sm:$0xf]
      %v60 = vld [vmem:[%s1 + $0x40] sm:$0xf]
      %v61 = vld [vmem:[%s1 + $0x44] sm:$0xf]
      %v62 = vld [vmem:[%s1 + $0x48] sm:$0xf]
      %v63 = vld [vmem:[%s1 + $0x4c] sm:$0xf]
      %v64 = vld [vmem:[%s1 + $0x50] sm:$0xf]
      %v65 = vld [vmem:[%s1 + $0x54] sm:$0xf]
      %v66 = vld [vmem:[%s1 + $0x58] sm:$0xf]
      %v67 = vld [vmem:[%s1 + $0x5c] sm:$0xf]
      %v68 = vld [vmem:[%s1 + $0x60] sm:$0xf]
      %v69 = vld [vmem:[%s1 + $0x64] sm:$0xf]
      %v70 = vld [vmem:[%s1 + $0x68] sm:$0xf]
      %v71 = vld [vmem:[%s1 + $0x6c] sm:$0xf]
      %v72 = vld [vmem:[%s1 + $0x70] sm:$0xf]
      %v73 = vld [vmem:[%s1 + $0x74] sm:$0xf]
      %v74 = vld [vmem:[%s1 + $0x78] sm:$0xf]
      %v75 = vld [vmem:[%s1 + $0x7c] sm:$0xf]
      %v76 = vld [vmem:[%s2] sm:$0x1]
      %v78 = vlaneseq
      %v79 = vshrl.u32 %v78, 7
      %v80 = vsub.s32 0, %v79
      %v81 = vrot.slane %v76, %v80
      %v115 = vunpack.c.l.b16 %v44
      %v116 = vunpack.c.l.b16 %v45
      %v117 = vunpack.c.l.b16 %v46
      %v118 = vunpack.c.l.b16 %v47
      %v119 = vunpack.c.l.b16 %v48
      %v120 = vunpack.c.l.b16 %v49
      %v121 = vunpack.c.l.b16 %v50
      %v122 = vunpack.c.l.b16 %v51
      %v123 = vunpack.c.l.b16 %v52
      %v124 = vunpack.c.l.b16 %v53
      %v125 = vunpack.c.l.b16 %v54
      %v126 = vunpack.c.l.b16 %v55
      %v127 = vunpack.c.l.b16 %v56
      %v128 = vunpack.c.l.b16 %v57
      %v129 = vunpack.c.l.b16 %v58
      %v130 = vunpack.c.l.b16 %v59
      %v131 = vunpack.c.l.b16 %v60
      %v132 = vunpack.c.l.b16 %v61
      %v133 = vunpack.c.l.b16 %v62
      %v134 = vunpack.c.l.b16 %v63
      %v135 = vunpack.c.l.b16 %v64
      %v136 = vunpack.c.l.b16 %v65
      %v137 = vunpack.c.l.b16 %v66
      %v138 = vunpack.c.l.b16 %v67
      %v139 = vunpack.c.l.b16 %v68
      %v140 = vunpack.c.l.b16 %v69
      %v141 = vunpack.c.l.b16 %v70
      %v142 = vunpack.c.l.b16 %v71
      %v143 = vunpack.c.l.b16 %v72
      %v144 = vunpack.c.l.b16 %v73
      %v145 = vunpack.c.l.b16 %v74
      %v146 = vunpack.c.l.b16 %v75
      %v147 = vpack.c.b16 %v116, %v115
      %v148 = vpack.c.b16 %v118, %v117
      %v149 = vpack.c.b16 %v120, %v119
      %v150 = vpack.c.b16 %v122, %v121
      %v151 = vpack.c.b16 %v124, %v123
      %v152 = vpack.c.b16 %v126, %v125
      %v153 = vpack.c.b16 %v128, %v127
      %v154 = vpack.c.b16 %v130, %v129
      %v155 = vpack.c.b16 %v132, %v131
      %v156 = vpack.c.b16 %v134, %v133
      %v157 = vpack.c.b16 %v136, %v135
      %v158 = vpack.c.b16 %v138, %v137
      %v159 = vpack.c.b16 %v140, %v139
      %v160 = vpack.c.b16 %v142, %v141
      %v161 = vpack.c.b16 %v144, %v143
      %v162 = vpack.c.b16 %v146, %v145
      %179 = vmatprep.subr.bf16.mxu0 0
      %180 = vmatpush1.bf16.msra.mxu0 %v154
      %181 = vmatprep.subr.bf16.mxu0 0
      %182 = vmatpush1.bf16.msra.mxu0 %v153
      %183 = vmatprep.subr.bf16.mxu0 0
      %184 = vmatpush1.bf16.msra.mxu0 %v152
      %185 = vmatprep.subr.bf16.mxu0 0
      %186 = vmatpush1.bf16.msra.mxu0 %v151
      %187 = vmatprep.subr.bf16.mxu0 0
      %188 = vmatpush1.bf16.msra.mxu0 %v150
      %189 = vmatprep.subr.bf16.mxu0 0
      %190 = vmatpush1.bf16.msra.mxu0 %v149
      %191 = vmatprep.subr.bf16.mxu0 0
      %192 = vmatpush1.bf16.msra.mxu0 %v148
      %193 = vmatprep.subr.bf16.mxu0 0
      %194 = vmatpush1.bf16.msra.mxu0 %v147
      %195 = vmatprep.subr.bf16.mxu0 0
      %196 = vmatpush2.bf16.msra.mxu0 %v162
      %197 = vmatprep.subr.bf16.mxu0 0
      %198 = vmatpush2.bf16.msra.mxu0 %v161
      %199 = vmatprep.subr.bf16.mxu0 0
      %200 = vmatpush2.bf16.msra.mxu0 %v160
      %201 = vmatprep.subr.bf16.mxu0 0
      %202 = vmatpush2.bf16.msra.mxu0 %v159
      %203 = vmatprep.subr.bf16.mxu0 0
      %204 = vmatpush2.bf16.msra.mxu0 %v158
      %205 = vmatprep.subr.bf16.mxu0 0
      %206 = vmatpush2.bf16.msra.mxu0 %v157
      %207 = vmatprep.subr.bf16.mxu0 0
      %208 = vmatpush2.bf16.msra.mxu0 %v156
      %209 = vmatprep.subr.bf16.mxu0 0
      %210 = vmatpush2.bf16.msra.mxu0 %v155
      %211 = vmatprep.mubr.bf16.mxu0 %v43
      %212 = vmatmul.mubr.bf16.gmra.mxu0 %v42
      %v213 = vpop.f32.mrf.mxu0
      %v214 = vadd.f32 %v81, %v213
      %v215 = vpop.f32.mrf.mxu0
      %v216 = vpop.f32.mrf.mxu0
      %v217 = vpop.f32.mrf.mxu0
      %218 = vdwg.mxu0
      %v219 = vmax.f32 %v214, 0.0
      %vm220 = vcmask 1041408
      %v221 = vsel %vm220, %v219, 0.0
      %v222 = vrot.slane %v221, 4
      %v223 = vadd.f32 %v221, %v222
      %v224 = vrot.slane %v223, 2
      %v225 = vadd.f32 %v223, %v224
      %v226 = vrot.slane %v225, 1
      %v227 = vadd.f32 %v225, %v226
      %v228 = vrcp.pop 2.0
      %v229 = vmul.f32 %v227, %v228
      %v230 = vsub.f32 %v219, %v229
      %v231 = vmul.f32 %v230, %v230
      %v232 = vsel %vm220, %v231, 0.0
      %v233 = vrot.slane %v232, 4
      %v234 = vadd.f32 %v232, %v233
      %v235 = vrot.slane %v234, 2
      %v236 = vadd.f32 %v234, %v235
      %v237 = vrot.slane %v236, 1
      %v238 = vadd.f32 %v236, %v237
      %v239 = vmul.f32 %v238, %v228
      %v240 = vadd.f32 %v239, 1e-05
      %v241 = vrsqrt.pop %v240
      %v242 = vmul.f32 %v230, %v241
      %v243 = vld [vmem:[%s3] sm:$0x1]
      %v245 = vlaneseq
      %v246 = vshrl.u32 %v245, 7
      %v247 = vsub.s32 0, %v246
      %v248 = vrot.slane %v243, %v247
      %v250 = vmul.f32 %v242, %v248
      %v251 = vld [vmem:[%s4] sm:$0x1]
      %v253 = vlaneseq
      %v254 = vshrl.u32 %v253, 7
      %v255 = vsub.s32 0, %v254
      %v256 = vrot.slane %v251, %v255
      %v258 = vadd.f32 %v250, %v256
      %v259 = vmul.f32 %v258, %v258
      %v260 = vsel %vm220, %v259, 0.0
      %261 = vadd.xlane.f32.xlu0 %v260
      %v262 = vpop.xlane.xlu0 %261
      %v263 = vadd.f32 %v262, 1e-12
      %v264 = vrsqrt.pop %v263
      %v265 = vmul.f32 %v258, %v264
      %v266 = vpack.c.bf16 %v265, %v265
      %267 = vst [vmem:[#allocation2] sm:$0x1] %v266
    $region29: #{xxxface_forward.3} parent=1 // pred_fallthru
      _
    %v268 = vld [vmem:[#allocation2] sm:$0x1]
    %v269 = vld [vmem:[%s5] sm:$0xf]
    %v270 = vld [vmem:[%s5 + $0x4] sm:$0xf]
    %v271 = vld [vmem:[%s5 + $0x8] sm:$0xf]
    %v272 = vld [vmem:[%s5 + $0xc] sm:$0xf]
    %v273 = vld [vmem:[%s5 + $0x10] sm:$0xf]
    %v274 = vld [vmem:[%s5 + $0x14] sm:$0xf]
    %v275 = vld [vmem:[%s5 + $0x18] sm:$0xf]
    %v276 = vld [vmem:[%s5 + $0x1c] sm:$0xf]
    %v277 = vld [vmem:[%s5 + $0x20] sm:$0xf]
    %v278 = vld [vmem:[%s5 + $0x24] sm:$0xf]
    %v279 = vld [vmem:[%s5 + $0x28] sm:$0xf]
    %v280 = vld [vmem:[%s5 + $0x2c] sm:$0xf]
    %v281 = vld [vmem:[%s5 + $0x30] sm:$0xf]
    %v282 = vld [vmem:[%s5 + $0x34] sm:$0xf]
    %v283 = vld [vmem:[%s5 + $0x38] sm:$0xf]
    %v284 = vld [vmem:[%s5 + $0x3c] sm:$0xf]
    %v285 = vld [vmem:[%s5 + $0x40] sm:$0xf]
    %v286 = vld [vmem:[%s5 + $0x44] sm:$0xf]
    %v287 = vld [vmem:[%s5 + $0x48] sm:$0xf]
    %v288 = vld [vmem:[%s5 + $0x4c] sm:$0xf]
    %v289 = vld [vmem:[%s5 + $0x50] sm:$0xf]
    %v290 = vld [vmem:[%s5 + $0x54] sm:$0xf]
    %v291 = vld [vmem:[%s5 + $0x58] sm:$0xf]
    %v292 = vld [vmem:[%s5 + $0x5c] sm:$0xf]
    %v293 = vld [vmem:[%s5 + $0x60] sm:$0xf]
    %v294 = vld [vmem:[%s5 + $0x64] sm:$0xf]
    %v295 = vld [vmem:[%s5 + $0x68] sm:$0xf]
    %v296 = vld [vmem:[%s5 + $0x6c] sm:$0xf]
    %v297 = vld [vmem:[%s5 + $0x70] sm:$0xf]
    %v298 = vld [vmem:[%s5 + $0x74] sm:$0xf]
    %v299 = vld [vmem:[%s5 + $0x78] sm:$0xf]
    %v300 = vld [vmem:[%s5 + $0x7c] sm:$0xf]
    %v333 = vunpack.c.l.b16 %v269
    %v334 = vunpack.c.l.b16 %v270
    %v335 = vunpack.c.l.b16 %v271
    %v336 = vunpack.c.l.b16 %v272
    %v337 = vunpack.c.l.b16 %v273
    %v338 = vunpack.c.l.b16 %v274
    %v339 = vunpack.c.l.b16 %v275
    %v340 = vunpack.c.l.b16 %v276
    %v341 = vunpack.c.l.b16 %v277
    %v342 = vunpack.c.l.b16 %v278
    %v343 = vunpack.c.l.b16 %v279
    %v344 = vunpack.c.l.b16 %v280
    %v345 = vunpack.c.l.b16 %v281
    %v346 = vunpack.c.l.b16 %v282
    %v347 = vunpack.c.l.b16 %v283
    %v348 = vunpack.c.l.b16 %v284
    %v349 = vunpack.c.l.b16 %v285
    %v350 = vunpack.c.l.b16 %v286
    %v351 = vunpack.c.l.b16 %v287
    %v352 = vunpack.c.l.b16 %v288
    %v353 = vunpack.c.l.b16 %v289
    %v354 = vunpack.c.l.b16 %v290
    %v355 = vunpack.c.l.b16 %v291
    %v356 = vunpack.c.l.b16 %v292
    %v357 = vunpack.c.l.b16 %v293
    %v358 = vunpack.c.l.b16 %v294
    %v359 = vunpack.c.l.b16 %v295
    %v360 = vunpack.c.l.b16 %v296
    %v361 = vunpack.c.l.b16 %v297
    %v362 = vunpack.c.l.b16 %v298
    %v363 = vunpack.c.l.b16 %v299
    %v364 = vunpack.c.l.b16 %v300
    %v365 = vpack.c.b16 %v334, %v333
    %v366 = vpack.c.b16 %v336, %v335
    %v367 = vpack.c.b16 %v338, %v337
    %v368 = vpack.c.b16 %v340, %v339
    %v369 = vpack.c.b16 %v342, %v341
    %v370 = vpack.c.b16 %v344, %v343
    %v371 = vpack.c.b16 %v346, %v345
    %v372 = vpack.c.b16 %v348, %v347
    %v373 = vpack.c.b16 %v350, %v349
    %v374 = vpack.c.b16 %v352, %v351
    %v375 = vpack.c.b16 %v354, %v353
    %v376 = vpack.c.b16 %v356, %v355
    %v377 = vpack.c.b16 %v358, %v357
    %v378 = vpack.c.b16 %v360, %v359
    %v379 = vpack.c.b16 %v362, %v361
    %v380 = vpack.c.b16 %v364, %v363
    %397 = vmatprep.subr.bf16.mxu0 0
    %398 = vmatpush1.bf16.xpose.msra.mxu0 %v372
    %399 = vmatprep.subr.bf16.mxu0 0
    %400 = vmatpush1.bf16.xpose.msra.mxu0 %v371
    %401 = vmatprep.subr.bf16.mxu0 0
    %402 = vmatpush1.bf16.xpose.msra.mxu0 %v370
    %403 = vmatprep.subr.bf16.mxu0 0
    %404 = vmatpush1.bf16.xpose.msra.mxu0 %v369
    %405 = vmatprep.subr.bf16.mxu0 0
    %406 = vmatpush1.bf16.xpose.msra.mxu0 %v368
    %407 = vmatprep.subr.bf16.mxu0 0
    %408 = vmatpush1.bf16.xpose.msra.mxu0 %v367
    %409 = vmatprep.subr.bf16.mxu0 0
    %410 = vmatpush1.bf16.xpose.msra.mxu0 %v366
    %411 = vmatprep.subr.bf16.mxu0 0
    %412 = vmatpush1.bf16.xpose.msra.mxu0 %v365
    %413 = vmatprep.subr.bf16.mxu0 0
    %414 = vmatpush2.bf16.xpose.msra.mxu0 %v380
    %415 = vmatprep.subr.bf16.mxu0 0
    %416 = vmatpush2.bf16.xpose.msra.mxu0 %v379
    %417 = vmatprep.subr.bf16.mxu0 0
    %418 = vmatpush2.bf16.xpose.msra.mxu0 %v378
    %419 = vmatprep.subr.bf16.mxu0 0
    %420 = vmatpush2.bf16.xpose.msra.mxu0 %v377
    %421 = vmatprep.subr.bf16.mxu0 0
    %422 = vmatpush2.bf16.xpose.msra.mxu0 %v376
    %423 = vmatprep.subr.bf16.mxu0 0
    %424 = vmatpush2.bf16.xpose.msra.mxu0 %v375
    %425 = vmatprep.subr.bf16.mxu0 0
    %426 = vmatpush2.bf16.xpose.msra.mxu0 %v374
    %427 = vmatprep.subr.bf16.mxu0 0
    %428 = vmatpush2.bf16.xpose.msra.mxu0 %v373
    %429 = vmatprep.mubr.bf16.mxu0 0
    %430 = vmatmul.mubr.bf16.gmra.mxu0 %v268
    %v431 = vpop.f32.mrf.mxu0
    %v432 = vadd.f32 0.0, %v431
    %v433 = vpop.f32.mrf.mxu0
    %v434 = vadd.f32 0.0, %v433
    %v435 = vpop.f32.mrf.mxu0
    %v436 = vpop.f32.mrf.mxu0
    %437 = vdwg.mxu0
    %v440 = vcombine.low %v432, %v434
    %v442 = vunpack.c.l.s4 1983009808
    %v443 = vunpack.c.0.s8 %v442
    %v444 = vlaneseq
    %v445 = vshrl.u32 %v444, 7
    %v446 = vsub.s32 %v443, %v445
    %v447 = vrot.slane %v440, %v446
    %449 = vst [vmem:[#allocation3] sm:$0xf] %v447
    // Predicated region
    $region30: #{xxxface_forward.3} parent=1 // pred_check
      _
    $region31: #{xxxface_forward.3} parent=1 // pred_check_branch
      %451 = sbr.rel (0) target = $region33
    $region32: #{xxxface_forward.3} parent=1 // pred_region
      %s453 = ssub.s32 64, 64
      %454 = vsyncadd [#allocation4], %s453
      %s456 = sshll.u32 [#allocation3], 4
      %s457 = int_to_ptr.vmem [resolvable:$true] %s456
      %459 = dma.vmem_to_hbm [thread:$0]  %s457, 64, %s6, [#allocation4]
    $region33: #{xxxface_forward.3} parent=1 // pred_fallthru
      _
    // Predicated region
    $region34: #{xxxface_forward.3} parent=1 // pred_check
      _
    $region35: #{xxxface_forward.3} parent=1 // pred_check_branch
      %461 = sbr.rel (0) target = $region37
    $region36: #{xxxface_forward.3} parent=1 // pred_region
      %462 = dma.done [#allocation4], 64
    $region37: #{xxxface_forward.3} parent=1 // pred_fallthru
      _
    %463 = vsyncpa [#allocation4], 1

// kernel: xxxface_forward.2
$region0: #{xxxface_forward.2}
  #allocation0 [shape = 'u32[]', space=smem, size = 0x4, offset = 0x4, fixed_abs, tag = 'smem constant byte address 0x4 - core index']
  #allocation1 [shape = 'u32[144,128]{1,0:T(1,128)}', space=vmem, size = 0x12000, scoped, tag = 'internal scratch']
  #allocation2 [shape = 'bf16[48,512]{1,0:T(8,128)(2,1)}', space=vmem, size = 0xc000, scoped, tag = 'scratch operand']
  %s0 = inlined_call_operand.vmem [shape: f32[4,512], index: 0, kind: input, shape index: {}]
  %s1 = inlined_call_operand.hbm [shape: bf16[48,128], index: 1, kind: input, shape index: {}]
  %s2 = inlined_call_operand.vmem [shape: f32[1,128], index: 2, kind: input, shape index: {}]
  %s3 = inlined_call_operand.vmem [shape: f32[9,512], index: 3, kind: input, shape index: {}]
  %s4 = inlined_call_operand.vmem [shape: f32[1,2,256], index: 4, kind: output, shape index: {}]
  %s5 = sld [smem:[#allocation0]]
  $region30: #{xxxface_forward.2} parent=0
    _
  %s7 = ssub.s32 1, %s5
  %s8 = scalar_select 0, %s7, %s5
  $region1: #{xxxface_forward.2} parent=0
    #allocation3 [shape = 'u8[12288]{0}', space=vmem, size = 0x3000, scoped, tag = 'input window, operand 1, single buffered']
    #allocation4 [shape = 's32[1]{0}', space=sflag, size = 0x4, scoped, tag = 'scoped memory for xxxface_forward.2']
    %9 = vsyncpa [#allocation4], 0
    // Predicated region
    $region2: #{xxxface_forward.2} parent=1 // pred_check
      _
    $region3: #{xxxface_forward.2} parent=1 // pred_check_branch
      %11 = sbr.rel (0) target = $region5
    $region4: #{xxxface_forward.2} parent=1 // pred_region
      _
    $region5: #{xxxface_forward.2} parent=1 // pred_fallthru
      _
    // Predicated region
    $region6: #{xxxface_forward.2} parent=1 // pred_check
      _
    $region7: #{xxxface_forward.2} parent=1 // pred_check_branch
      %13 = sbr.rel (0) target = $region9
    $region8: #{xxxface_forward.2} parent=1 // pred_region
      %s15 = ssub.s32 384, 384
      %16 = vsyncadd [#allocation4], %s15
      %s17 = sshll.u32 [#allocation3], 4
      %s18 = int_to_ptr.vmem [resolvable:$true] %s17
      %23 = dma.hbm_to_vmem [thread:$0]  %s1, 384, %s18, [#allocation4], 64, 64, 4
    $region9: #{xxxface_forward.2} parent=1 // pred_fallthru
      _
    // Predicated region
    $region10: #{xxxface_forward.2} parent=1 // pred_check
      _
    $region11: #{xxxface_forward.2} parent=1 // pred_check_branch
      %25 = sbr.rel (0) target = $region13
    $region12: #{xxxface_forward.2} parent=1 // pred_region
      _
    $region13: #{xxxface_forward.2} parent=1 // pred_fallthru
      _
    // Predicated region
    $region14: #{xxxface_forward.2} parent=1 // pred_check
      _
    $region15: #{xxxface_forward.2} parent=1 // pred_check_branch
      %27 = sbr.rel (0) target = $region17
    $region16: #{xxxface_forward.2} parent=1 // pred_region
      _
    $region17: #{xxxface_forward.2} parent=1 // pred_fallthru
      _
    // Predicated region
    $region18: #{xxxface_forward.2} parent=1 // pred_check
      _
    $region19: #{xxxface_forward.2} parent=1 // pred_check_branch
      %29 = sbr.rel (0) target = $region21
    $region20: #{xxxface_forward.2} parent=1 // pred_region
      %30 = dma.done [#allocation4], 384
    $region21: #{xxxface_forward.2} parent=1 // pred_fallthru
      _
    %v32 = vld [vmem:[%s0] sm:$0xff]
    %v33 = vld [vmem:[%s0 + $0x8] sm:$0xff]
    %v34 = vld [vmem:[%s3] sm:$0xff]
    %v35 = vld [vmem:[%s3 + $0x8] sm:$0xff]
    %v36 = vld [vmem:[%s3 + $0x10] sm:$0xff]
    %v37 = vld [vmem:[%s3 + $0x18] sm:$0xff]
    %v38 = vld [vmem:[%s3 + $0x20] sm:$0x1]
    %v39 = vld [vmem:[%s3 + $0x28] sm:$0x1]
    %v40 = vld [vmem:[%s3 + $0x30] sm:$0x1]
    %v41 = vld [vmem:[%s3 + $0x38] sm:$0x1]
    %42 = vst [vmem:[#allocation2 + $0x40] sm:$0xcc] 0
    %43 = vst [vmem:[#allocation2 + $0x48] sm:$0xcc] 0
    %44 = vst [vmem:[#allocation2 + $0x50] sm:$0xff] 0
    %45 = vst [vmem:[#allocation2 + $0x58] sm:$0xff] 0
    %v48 = vcombine.high %v32, %v32
    %v49 = vcombine.high %v33, %v33
    %52 = vrot.lane.b32.xlu0 %v32, 17
    %v53 = vpop.permute.xlu0 %52
    %54 = vrot.lane.b32.xlu0 %v48, 17
    %v55 = vpop.permute.xlu0 %54
    %56 = vrot.lane.b32.xlu0 %v33, 17
    %v57 = vpop.permute.xlu0 %56
    %58 = vrot.lane.b32.xlu0 %v49, 17
    %v59 = vpop.permute.xlu0 %58
    %v60 = vlaneseq
    %v61 = vand.u32 %v60, 127
    %vm62 = vcmp.lt.s32.totalorder %v61, 17
    %v63 = vsel %vm62, %v57, %v59
    %v64 = vsel %vm62, %v55, %v57
    %v65 = vsel %vm62, %v53, %v55
    %v66 = vsel %vm62, %v59, %v53
    %v67 = vlaneseq
    %v68 = vshrl.u32 %v67, 7
    %v69 = vsub.s32 0, %v68
    %v70 = vrot.slane %v34, %v69
    %v71 = vlaneseq
    %v72 = vshrl.u32 %v71, 7
    %v73 = vsub.s32 0, %v72
    %v74 = vrot.slane %v35, %v73
    %v75 = vlaneseq
    %v76 = vshrl.u32 %v75, 7
    %v77 = vsub.s32 0, %v76
    %v78 = vrot.slane %v36, %v77
    %v79 = vlaneseq
    %v80 = vshrl.u32 %v79, 7
    %v81 = vsub.s32 0, %v80
    %v82 = vrot.slane %v37, %v81
    %v83 = vmul.f32 %v66, %v70
    %v84 = vmul.f32 %v65, %v74
    %v85 = vmul.f32 %v64, %v78
    %v86 = vmul.f32 %v63, %v82
    %v87 = vpack.c.bf16 %v83, %v83
    %v88 = vpack.c.bf16 %v84, %v84
    %v89 = vpack.c.bf16 %v85, %v85
    %v90 = vpack.c.bf16 %v86, %v86
    %v95 = vunpack.c.l.b16 %v87
    %v96 = vunpack.c.l.b16 %v88
    %v97 = vunpack.c.l.b16 %v89
    %v98 = vunpack.c.l.b16 %v90
    %v99 = vpack.c.b16 %v96, %v95
    %v100 = vpack.c.b16 %v98, %v97
    %103 = vst [vmem:[#allocation2] sm:$0x33] %v99
    %104 = vst [vmem:[#allocation2 + $0x8] sm:$0x33] %v100
    %105 = vrot.lane.b32.xlu0 %v32, 16
    %v106 = vpop.permute.xlu0 %105
    %107 = vrot.lane.b32.xlu0 %v48, 16
    %v108 = vpop.permute.xlu0 %107
    %109 = vrot.lane.b32.xlu0 %v33, 16
    %v110 = vpop.permute.xlu0 %109
    %111 = vrot.lane.b32.xlu0 %v49, 16
    %v112 = vpop.permute.xlu0 %111
    %vm113 = vcmp.lt.s32.totalorder %v61, 16
    %v114 = vsel %vm113, %v110, %v112
    %v115 = vsel %vm113, %v108, %v110
    %v116 = vsel %vm113, %v106, %v108
    %v117 = vsel %vm113, %v112, %v106
    %v118 = vlaneseq
    %v119 = vshrl.u32 %v118, 7
    %v120 = vsub.s32 1, %v119
    %v121 = vrot.slane %v34, %v120
    %v122 = vlaneseq
    %v123 = vshrl.u32 %v122, 7
    %v124 = vsub.s32 1, %v123
    %v125 = vrot.slane %v35, %v124
    %v126 = vlaneseq
    %v127 = vshrl.u32 %v126, 7
    %v128 = vsub.s32 1, %v127
    %v129 = vrot.slane %v36, %v128
    %v130 = vlaneseq
    %v131 = vshrl.u32 %v130, 7
    %v132 = vsub.s32 1, %v131
    %v133 = vrot.slane %v37, %v132
    %v134 = vmul.f32 %v117, %v121
    %v135 = vmul.f32 %v116, %v125
    %v136 = vmul.f32 %v115, %v129
    %v137 = vmul.f32 %v114, %v133
    %v138 = vpack.c.bf16 %v134, %v134
    %v139 = vpack.c.bf16 %v135, %v135
    %v140 = vpack.c.bf16 %v136, %v136
    %v141 = vpack.c.bf16 %v137, %v137
    %v146 = vunpack.c.l.b16 %v138
    %v147 = vunpack.c.l.b16 %v139
    %v148 = vunpack.c.l.b16 %v140
    %v149 = vunpack.c.l.b16 %v141
    %v150 = vpack.c.b16 %v147, %v146
    %v151 = vpack.c.b16 %v149, %v148
    %v152 = vrot.slane %v150, 6
    %v153 = vrot.slane %v151, 6
    %156 = vst [vmem:[#allocation2] sm:$0xcc] %v152
    %157 = vst [vmem:[#allocation2 + $0x8] sm:$0xcc] %v153
    %158 = vrot.lane.b32.xlu0 %v32, 15
    %v159 = vpop.permute.xlu0 %158
    %160 = vrot.lane.b32.xlu0 %v48, 15
    %v161 = vpop.permute.xlu0 %160
    %162 = vrot.lane.b32.xlu0 %v33, 15
    %v163 = vpop.permute.xlu0 %162
    %164 = vrot.lane.b32.xlu0 %v49, 15
    %v165 = vpop.permute.xlu0 %164
    %vm166 = vcmp.lt.s32.totalorder %v61, 15
    %v167 = vsel %vm166, %v163, %v165
    %v168 = vsel %vm166, %v161, %v163
    %v169 = vsel %vm166, %v159, %v161
    %v170 = vsel %vm166, %v165, %v159
    %v171 = vlaneseq
    %v172 = vshrl.u32 %v171, 7
    %v173 = vsub.s32 2, %v172
    %v174 = vrot.slane %v34, %v173
    %v175 = vlaneseq
    %v176 = vshrl.u32 %v175, 7
    %v177 = vsub.s32 2, %v176
    %v178 = vrot.slane %v35, %v177
    %v179 = vlaneseq
    %v180 = vshrl.u32 %v179, 7
    %v181 = vsub.s32 2, %v180
    %v182 = vrot.slane %v36, %v181
    %v183 = vlaneseq
    %v184 = vshrl.u32 %v183, 7
    %v185 = vsub.s32 2, %v184
    %v186 = vrot.slane %v37, %v185
    %v187 = vmul.f32 %v170, %v174
    %v188 = vmul.f32 %v169, %v178
    %v189 = vmul.f32 %v168, %v182
    %v190 = vmul.f32 %v167, %v186
    %v191 = vpack.c.bf16 %v187, %v187
    %v192 = vpack.c.bf16 %v188, %v188
    %v193 = vpack.c.bf16 %v189, %v189
    %v194 = vpack.c.bf16 %v190, %v190
    %v199 = vunpack.c.l.b16 %v191
    %v200 = vunpack.c.l.b16 %v192
    %v201 = vunpack.c.l.b16 %v193
    %v202 = vunpack.c.l.b16 %v194
    %v203 = vpack.c.b16 %v200, %v199
    %v204 = vpack.c.b16 %v202, %v201
    %207 = vst [vmem:[#allocation2 + $0x10] sm:$0x33] %v203
    %208 = vst [vmem:[#allocation2 + $0x18] sm:$0x33] %v204
    %209 = vrot.lane.b32.xlu0 %v32, 1
    %v210 = vpop.permute.xlu0 %209
    %211 = vrot.lane.b32.xlu0 %v48, 1
    %v212 = vpop.permute.xlu0 %211
    %213 = vrot.lane.b32.xlu0 %v33, 1
    %v214 = vpop.permute.xlu0 %213
    %215 = vrot.lane.b32.xlu0 %v49, 1
    %v216 = vpop.permute.xlu0 %215
    %vm217 = vcmp.lt.s32.totalorder %v61, 1
    %v218 = vsel %vm217, %v214, %v216
    %v219 = vsel %vm217, %v212, %v214
    %v220 = vsel %vm217, %v210, %v212
    %v221 = vsel %vm217, %v216, %v210
    %v222 = vlaneseq
    %v223 = vshrl.u32 %v222, 7
    %v224 = vsub.s32 3, %v223
    %v225 = vrot.slane %v34, %v224
    %v226 = vlaneseq
    %v227 = vshrl.u32 %v226, 7
    %v228 = vsub.s32 3, %v227
    %v229 = vrot.slane %v35, %v228
    %v230 = vlaneseq
    %v231 = vshrl.u32 %v230, 7
    %v232 = vsub.s32 3, %v231
    %v233 = vrot.slane %v36, %v232
    %v234 = vlaneseq
    %v235 = vshrl.u32 %v234, 7
    %v236 = vsub.s32 3, %v235
    %v237 = vrot.slane %v37, %v236
    %v238 = vmul.f32 %v221, %v225
    %v239 = vmul.f32 %v220, %v229
    %v240 = vmul.f32 %v219, %v233
    %v241 = vmul.f32 %v218, %v237
    %v242 = vpack.c.bf16 %v238, %v238
    %v243 = vpack.c.bf16 %v239, %v239
    %v244 = vpack.c.bf16 %v240, %v240
    %v245 = vpack.c.bf16 %v241, %v241
    %v250 = vunpack.c.l.b16 %v242
    %v251 = vunpack.c.l.b16 %v243
    %v252 = vunpack.c.l.b16 %v244
    %v253 = vunpack.c.l.b16 %v245
    %v254 = vpack.c.b16 %v251, %v250
    %v255 = vpack.c.b16 %v253, %v252
    %v256 = vrot.slane %v254, 6
    %v257 = vrot.slane %v255, 6
    %260 = vst [vmem:[#allocation2 + $0x10] sm:$0xcc] %v256
    %261 = vst [vmem:[#allocation2 + $0x18] sm:$0xcc] %v257
    %v262 = vpack.c.bf16 %v32, %v32
    %v263 = vpack.c.bf16 %v48, %v48
    %v264 = vpack.c.bf16 %v33, %v33
    %v265 = vpack.c.bf16 %v49, %v49
    %v270 = vunpack.c.l.b16 %v262
    %v271 = vunpack.c.l.b16 %v263
    %v272 = vunpack.c.l.b16 %v264
    %v273 = vunpack.c.l.b16 %v265
    %v274 = vpack.c.b16 %v271, %v270
    %v275 = vpack.c.b16 %v273, %v272
    %278 = vst [vmem:[#allocation2 + $0x20] sm:$0x33] %v274
    %279 = vst [vmem:[#allocation2 + $0x28] sm:$0x33] %v275
    %280 = vrot.lane.b32.xlu0 %v32, 127
    %v281 = vpop.permute.xlu0 %280
    %282 = vrot.lane.b32.xlu0 %v48, 127
    %v283 = vpop.permute.xlu0 %282
    %284 = vrot.lane.b32.xlu0 %v33, 127
    %v285 = vpop.permute.xlu0 %284
    %286 = vrot.lane.b32.xlu0 %v49, 127
    %v287 = vpop.permute.xlu0 %286
    %vm288 = vcmp.lt.s32.totalorder %v61, 127
    %v289 = vsel %vm288, %v285, %v287
    %v290 = vsel %vm288, %v283, %v285
    %v291 = vsel %vm288, %v281, %v283
    %v292 = vsel %vm288, %v287, %v281
    %v293 = vlaneseq
    %v294 = vshrl.u32 %v293, 7
    %v295 = vsub.s32 5, %v294
    %v296 = vrot.slane %v34, %v295
    %v297 = vlaneseq
    %v298 = vshrl.u32 %v297, 7
    %v299 = vsub.s32 5, %v298
    %v300 = vrot.slane %v35, %v299
    %v301 = vlaneseq
    %v302 = vshrl.u32 %v301, 7
    %v303 = vsub.s32 5, %v302
    %v304 = vrot.slane %v36, %v303
    %v305 = vlaneseq
    %v306 = vshrl.u32 %v305, 7
    %v307 = vsub.s32 5, %v306
    %v308 = vrot.slane %v37, %v307
    %v309 = vmul.f32 %v291, %v296
    %v310 = vmul.f32 %v290, %v300
    %v311 = vmul.f32 %v289, %v304
    %v312 = vmul.f32 %v292, %v308
    %v313 = vpack.c.bf16 %v309, %v309
    %v314 = vpack.c.bf16 %v310, %v310
    %v315 = vpack.c.bf16 %v311, %v311
    %v316 = vpack.c.bf16 %v312, %v312
    %v321 = vunpack.c.l.b16 %v313
    %v322 = vunpack.c.l.b16 %v314
    %v323 = vunpack.c.l.b16 %v315
    %v324 = vunpack.c.l.b16 %v316
    %v325 = vpack.c.b16 %v322, %v321
    %v326 = vpack.c.b16 %v324, %v323
    %v327 = vrot.slane %v325, 6
    %v328 = vrot.slane %v326, 6
    %331 = vst [vmem:[#allocation2 + $0x20] sm:$0xcc] %v327
    %332 = vst [vmem:[#allocation2 + $0x28] sm:$0xcc] %v328
    %333 = vrot.lane.b32.xlu0 %v32, 113
    %v334 = vpop.permute.xlu0 %333
    %335 = vrot.lane.b32.xlu0 %v48, 113
    %v336 = vpop.permute.xlu0 %335
    %337 = vrot.lane.b32.xlu0 %v33, 113
    %v338 = vpop.permute.xlu0 %337
    %339 = vrot.lane.b32.xlu0 %v49, 113
    %v340 = vpop.permute.xlu0 %339
    %vm341 = vcmp.lt.s32.totalorder %v61, 113
    %v342 = vsel %vm341, %v338, %v340
    %v343 = vsel %vm341, %v336, %v338
    %v344 = vsel %vm341, %v334, %v336
    %v345 = vsel %vm341, %v340, %v334
    %v346 = vlaneseq
    %v347 = vshrl.u32 %v346, 7
    %v348 = vsub.s32 6, %v347
    %v349 = vrot.slane %v34, %v348
    %v350 = vlaneseq
    %v351 = vshrl.u32 %v350, 7
    %v352 = vsub.s32 6, %v351
    %v353 = vrot.slane %v35, %v352
    %v354 = vlaneseq
    %v355 = vshrl.u32 %v354, 7
    %v356 = vsub.s32 6, %v355
    %v357 = vrot.slane %v36, %v356
    %v358 = vlaneseq
    %v359 = vshrl.u32 %v358, 7
    %v360 = vsub.s32 6, %v359
    %v361 = vrot.slane %v37, %v360
    %v362 = vmul.f32 %v344, %v349
    %v363 = vmul.f32 %v343, %v353
    %v364 = vmul.f32 %v342, %v357
    %v365 = vmul.f32 %v345, %v361
    %v366 = vpack.c.bf16 %v362, %v362
    %v367 = vpack.c.bf16 %v363, %v363
    %v368 = vpack.c.bf16 %v364, %v364
    %v369 = vpack.c.bf16 %v365, %v365
    %v374 = vunpack.c.l.b16 %v366
    %v375 = vunpack.c.l.b16 %v367
    %v376 = vunpack.c.l.b16 %v368
    %v377 = vunpack.c.l.b16 %v369
    %v378 = vpack.c.b16 %v375, %v374
    %v379 = vpack.c.b16 %v377, %v376
    %382 = vst [vmem:[#allocation2 + $0x30] sm:$0x33] %v378
    %383 = vst [vmem:[#allocation2 + $0x38] sm:$0x33] %v379
    %384 = vrot.lane.b32.xlu0 %v32, 112
    %v385 = vpop.permute.xlu0 %384
    %386 = vrot.lane.b32.xlu0 %v48, 112
    %v387 = vpop.permute.xlu0 %386
    %388 = vrot.lane.b32.xlu0 %v33, 112
    %v389 = vpop.permute.xlu0 %388
    %390 = vrot.lane.b32.xlu0 %v49, 112
    %v391 = vpop.permute.xlu0 %390
    %vm392 = vcmp.lt.s32.totalorder %v61, 112
    %v393 = vsel %vm392, %v389, %v391
    %v394 = vsel %vm392, %v387, %v389
    %v395 = vsel %vm392, %v385, %v387
    %v396 = vsel %vm392, %v391, %v385
    %v397 = vlaneseq
    %v398 = vshrl.u32 %v397, 7
    %v399 = vsub.s32 7, %v398
    %v400 = vrot.slane %v34, %v399
    %v401 = vlaneseq
    %v402 = vshrl.u32 %v401, 7
    %v403 = vsub.s32 7, %v402
    %v404 = vrot.slane %v35, %v403
    %v405 = vlaneseq
    %v406 = vshrl.u32 %v405, 7
    %v407 = vsub.s32 7, %v406
    %v408 = vrot.slane %v36, %v407
    %v409 = vlaneseq
    %v410 = vshrl.u32 %v409, 7
    %v411 = vsub.s32 7, %v410
    %v412 = vrot.slane %v37, %v411
    %v413 = vmul.f32 %v395, %v400
    %v414 = vmul.f32 %v394, %v404
    %v415 = vmul.f32 %v393, %v408
    %v416 = vmul.f32 %v396, %v412
    %v417 = vpack.c.bf16 %v413, %v413
    %v418 = vpack.c.bf16 %v414, %v414
    %v419 = vpack.c.bf16 %v415, %v415
    %v420 = vpack.c.bf16 %v416, %v416
    %v425 = vunpack.c.l.b16 %v417
    %v426 = vunpack.c.l.b16 %v418
    %v427 = vunpack.c.l.b16 %v419
    %v428 = vunpack.c.l.b16 %v420
    %v429 = vpack.c.b16 %v426, %v425
    %v430 = vpack.c.b16 %v428, %v427
    %v431 = vrot.slane %v429, 6
    %v432 = vrot.slane %v430, 6
    %435 = vst [vmem:[#allocation2 + $0x30] sm:$0xcc] %v431
    %436 = vst [vmem:[#allocation2 + $0x38] sm:$0xcc] %v432
    %437 = vrot.lane.b32.xlu0 %v32, 111
    %v438 = vpop.permute.xlu0 %437
    %439 = vrot.lane.b32.xlu0 %v48, 111
    %v440 = vpop.permute.xlu0 %439
    %441 = vrot.lane.b32.xlu0 %v33, 111
    %v442 = vpop.permute.xlu0 %441
    %443 = vrot.lane.b32.xlu0 %v49, 111
    %v444 = vpop.permute.xlu0 %443
    %vm445 = vcmp.lt.s32.totalorder %v61, 111
    %v446 = vsel %vm445, %v442, %v444
    %v447 = vsel %vm445, %v440, %v442
    %v448 = vsel %vm445, %v438, %v440
    %v449 = vsel %vm445, %v444, %v438
    %v450 = vlaneseq
    %v451 = vshrl.u32 %v450, 7
    %v452 = vsub.s32 0, %v451
    %v453 = vrot.slane %v38, %v452
    %v454 = vlaneseq
    %v455 = vshrl.u32 %v454, 7
    %v456 = vsub.s32 0, %v455
    %v457 = vrot.slane %v39, %v456
    %v458 = vlaneseq
    %v459 = vshrl.u32 %v458, 7
    %v460 = vsub.s32 0, %v459
    %v461 = vrot.slane %v40, %v460
    %v462 = vlaneseq
    %v463 = vshrl.u32 %v462, 7
    %v464 = vsub.s32 0, %v463
    %v465 = vrot.slane %v41, %v464
    %v466 = vmul.f32 %v448, %v453
    %v467 = vmul.f32 %v447, %v457
    %v468 = vmul.f32 %v446, %v461
    %v469 = vmul.f32 %v449, %v465
    %v470 = vpack.c.bf16 %v466, %v466
    %v471 = vpack.c.bf16 %v467, %v467
    %v472 = vpack.c.bf16 %v468, %v468
    %v473 = vpack.c.bf16 %v469, %v469
    %v478 = vunpack.c.l.b16 %v470
    %v479 = vunpack.c.l.b16 %v471
    %v480 = vunpack.c.l.b16 %v472
    %v481 = vunpack.c.l.b16 %v473
    %v482 = vpack.c.b16 %v479, %v478
    %v483 = vpack.c.b16 %v481, %v480
    %486 = vst [vmem:[#allocation2 + $0x40] sm:$0x33] %v482
    %487 = vst [vmem:[#allocation2 + $0x48] sm:$0x33] %v483
    %v488 = vld [vmem:[#allocation2] sm:$0xff]
    %v489 = vld [vmem:[#allocation2 + $0x8] sm:$0xff]
    %v490 = vld [vmem:[#allocation2 + $0x10] sm:$0xff]
    %v491 = vld [vmem:[#allocation2 + $0x18] sm:$0xff]
    %v492 = vld [vmem:[#allocation2 + $0x20] sm:$0xff]
    %v493 = vld [vmem:[#allocation2 + $0x28] sm:$0xff]
    %v494 = vld [vmem:[#allocation2 + $0x30] sm:$0xff]
    %v495 = vld [vmem:[#allocation2 + $0x38] sm:$0xff]
    %v496 = vld [vmem:[#allocation2 + $0x40] sm:$0xff]
    %v497 = vld [vmem:[#allocation2 + $0x48] sm:$0xff]
    %v498 = vld [vmem:[#allocation2 + $0x50] sm:$0xff]
    %v499 = vld [vmem:[#allocation2 + $0x58] sm:$0xff]
    %v500 = vld [vmem:[#allocation3] sm:$0xf]
    %v501 = vld [vmem:[#allocation3 + $0x4] sm:$0xf]
    %v502 = vld [vmem:[#allocation3 + $0x8] sm:$0xf]
    %v503 = vld [vmem:[#allocation3 + $0xc] sm:$0xf]
    %v504 = vld [vmem:[#allocation3 + $0x10] sm:$0xf]
    %v505 = vld [vmem:[#allocation3 + $0x14] sm:$0xf]
    %v506 = vld [vmem:[%s2] sm:$0x1]
    %v508 = vlaneseq
    %v509 = vshrl.u32 %v508, 7
    %v510 = vsub.s32 0, %v509
    %v511 = vrot.slane %v506, %v510
    %v525 = vunpack.c.l.b16 %v488
    %v526 = vunpack.c.h.b16 %v488
    %v527 = vunpack.c.l.b16 %v489
    %v528 = vunpack.c.h.b16 %v489
    %v529 = vunpack.c.l.b16 %v490
    %v530 = vunpack.c.h.b16 %v490
    %v531 = vunpack.c.l.b16 %v491
    %v532 = vunpack.c.h.b16 %v491
    %v533 = vunpack.c.l.b16 %v492
    %v534 = vunpack.c.h.b16 %v492
    %v535 = vunpack.c.l.b16 %v493
    %v536 = vunpack.c.h.b16 %v493
    %v537 = vunpack.c.l.b16 %v494
    %v538 = vunpack.c.h.b16 %v494
    %v539 = vunpack.c.l.b16 %v495
    %v540 = vunpack.c.h.b16 %v495
    %v541 = vunpack.c.l.b16 %v496
    %v542 = vunpack.c.h.b16 %v496
    %v543 = vunpack.c.l.b16 %v497
    %v544 = vunpack.c.h.b16 %v497
    %v545 = vunpack.c.l.b16 %v498
    %v546 = vunpack.c.h.b16 %v498
    %v547 = vunpack.c.l.b16 %v499
    %v548 = vunpack.c.h.b16 %v499
    %v549 = vpack.c.b16 %v529, %v525
    %v550 = vpack.c.b16 %v530, %v526
    %v551 = vpack.c.b16 %v531, %v527
    %v552 = vpack.c.b16 %v532, %v528
    %v553 = vpack.c.b16 %v537, %v533
    %v554 = vpack.c.b16 %v538, %v534
    %v555 = vpack.c.b16 %v539, %v535
    %v556 = vpack.c.b16 %v540, %v536
    %v557 = vpack.c.b16 %v545, %v541
    %v558 = vpack.c.b16 %v546, %v542
    %v559 = vpack.c.b16 %v547, %v543
    %v560 = vpack.c.b16 %v548, %v544
    %573 = vxpose.xlu0.c.b16.start [1/8] %v549, 128
    %574 = vxpose.xlu0.c.b16.cont [2/8] %v553, 128
    %575 = vxpose.xlu0.c.b16.cont [3/8] %v557, 128
    %576 = vxpose.xlu0.c.b16.cont [4/8] 0, 128
    %577 = vxpose.xlu0.c.b16.cont [5/8] 0, 128
    %578 = vxpose.xlu0.c.b16.cont [6/8] 0, 128
    %579 = vxpose.xlu0.c.b16.cont [7/8] 0, 128
    %580 = vxpose.xlu0.c.b16.end [8/8] 0, 128
    %v581 = vpop.trf.xlu0
    %v582 = vpop.trf.xlu0
    %v583 = vpop.trf.xlu0
    %v584 = vpop.trf.xlu0
    %v585 = vpop.trf.xlu0
    %v586 = vpop.trf.xlu0
    %v587 = vpop.trf.xlu0
    %v588 = vpop.trf.xlu0
    %589 = vxpose.xlu0.c.b16.start [1/8] %v550, 128
    %590 = vxpose.xlu0.c.b16.cont [2/8] %v554, 128
    %591 = vxpose.xlu0.c.b16.cont [3/8] %v558, 128
    %592 = vxpose.xlu0.c.b16.cont [4/8] 0, 128
    %593 = vxpose.xlu0.c.b16.cont [5/8] 0, 128
    %594 = vxpose.xlu0.c.b16.cont [6/8] 0, 128
    %595 = vxpose.xlu0.c.b16.cont [7/8] 0, 128
    %596 = vxpose.xlu0.c.b16.end [8/8] 0, 128
    %v597 = vpop.trf.xlu0
    %v598 = vpop.trf.xlu0
    %v599 = vpop.trf.xlu0
    %v600 = vpop.trf.xlu0
    %v601 = vpop.trf.xlu0
    %v602 = vpop.trf.xlu0
    %v603 = vpop.trf.xlu0
    %v604 = vpop.trf.xlu0
    %605 = vxpose.xlu0.c.b16.start [1/8] %v551, 128
    %606 = vxpose.xlu0.c.b16.cont [2/8] %v555, 128
    %607 = vxpose.xlu0.c.b16.cont [3/8] %v559, 128
    %608 = vxpose.xlu0.c.b16.cont [4/8] 0, 128
    %609 = vxpose.xlu0.c.b16.cont [5/8] 0, 128
    %610 = vxpose.xlu0.c.b16.cont [6/8] 0, 128
    %611 = vxpose.xlu0.c.b16.cont [7/8] 0, 128
    %612 = vxpose.xlu0.c.b16.end [8/8] 0, 128
    %v613 = vpop.trf.xlu0
    %v614 = vpop.trf.xlu0
    %v615 = vpop.trf.xlu0
    %v616 = vpop.trf.xlu0
    %v617 = vpop.trf.xlu0
    %v618 = vpop.trf.xlu0
    %v619 = vpop.trf.xlu0
    %v620 = vpop.trf.xlu0
    %621 = vxpose.xlu0.c.b16.start [1/8] %v552, 128
    %622 = vxpose.xlu0.c.b16.cont [2/8] %v556, 128
    %623 = vxpose.xlu0.c.b16.cont [3/8] %v560, 128
    %624 = vxpose.xlu0.c.b16.cont [4/8] 0, 128
    %625 = vxpose.xlu0.c.b16.cont [5/8] 0, 128
    %626 = vxpose.xlu0.c.b16.cont [6/8] 0, 128
    %627 = vxpose.xlu0.c.b16.cont [7/8] 0, 128
    %628 = vxpose.xlu0.c.b16.end [8/8] 0, 128
    %v629 = vpop.trf.xlu0
    %v630 = vpop.trf.xlu0
    %v631 = vpop.trf.xlu0
    %v632 = vpop.trf.xlu0
    %v633 = vpop.trf.xlu0
    %v634 = vpop.trf.xlu0
    %v635 = vpop.trf.xlu0
    %v636 = vpop.trf.xlu0
    %v643 = vunpack.c.l.b16 %v500
    %v644 = vunpack.c.l.b16 %v501
    %v645 = vunpack.c.l.b16 %v502
    %v646 = vunpack.c.l.b16 %v503
    %v647 = vunpack.c.l.b16 %v504
    %v648 = vunpack.c.l.b16 %v505
    %v649 = vpack.c.b16 %v644, %v643
    %v650 = vpack.c.b16 %v646, %v645
    %v651 = vpack.c.b16 %v648, %v647
    %vm655 = vcmask 392192
    %v657 = vsel %vm655, %v581, 0
    %v660 = vsel %vm655, %v582, 0
    %v663 = vsel %vm655, %v583, 0
    %v666 = vsel %vm655, %v584, 0
    %v669 = vsel %vm655, %v585, 0
    %v672 = vsel %vm655, %v586, 0
    %v675 = vsel %vm655, %v587, 0
    %v678 = vsel %vm655, %v588, 0
    %v681 = vsel %vm655, %v597, 0
    %v684 = vsel %vm655, %v598, 0
    %v687 = vsel %vm655, %v599, 0
    %v690 = vsel %vm655, %v600, 0
    %v693 = vsel %vm655, %v601, 0
    %v696 = vsel %vm655, %v602, 0
    %v699 = vsel %vm655, %v603, 0
    %v702 = vsel %vm655, %v604, 0
    %v705 = vsel %vm655, %v613, 0
    %v708 = vsel %vm655, %v614, 0
    %v711 = vsel %vm655, %v615, 0
    %v714 = vsel %vm655, %v616, 0
    %v717 = vsel %vm655, %v617, 0
    %v720 = vsel %vm655, %v618, 0
    %v723 = vsel %vm655, %v619, 0
    %v726 = vsel %vm655, %v620, 0
    %v729 = vsel %vm655, %v629, 0
    %v732 = vsel %vm655, %v630, 0
    %v735 = vsel %vm655, %v631, 0
    %v738 = vsel %vm655, %v632, 0
    %v741 = vsel %vm655, %v633, 0
    %v744 = vsel %vm655, %v634, 0
    %v747 = vsel %vm655, %v635, 0
    %v750 = vsel %vm655, %v636, 0
    %752 = vmatprep.subr.bf16.mxu0 0
    %753 = vmatpush1.bf16.msra.mxu0 0
    %754 = vmatprep.subr.bf16.mxu0 0
    %755 = vmatpush1.bf16.msra.mxu0 0
    %756 = vmatprep.subr.bf16.mxu0 0
    %757 = vmatpush1.bf16.msra.mxu0 0
    %758 = vmatprep.subr.bf16.mxu0 0
    %759 = vmatpush1.bf16.msra.mxu0 0
    %760 = vmatprep.subr.bf16.mxu0 0
    %761 = vmatpush1.bf16.msra.mxu0 0
    %762 = vmatprep.subr.bf16.mxu0 0
    %763 = vmatpush1.bf16.msra.mxu0 %v651
    %764 = vmatprep.subr.bf16.mxu0 0
    %765 = vmatpush1.bf16.msra.mxu0 %v650
    %766 = vmatprep.subr.bf16.mxu0 0
    %767 = vmatpush1.bf16.msra.mxu0 %v649
    %768 = vmatprep.subr.bf16.mxu0 0
    %769 = vmatpush2.bf16.msra.mxu0 0
    %770 = vmatprep.subr.bf16.mxu0 0
    %771 = vmatpush2.bf16.msra.mxu0 0
    %772 = vmatprep.subr.bf16.mxu0 0
    %773 = vmatpush2.bf16.msra.mxu0 0
    %774 = vmatprep.subr.bf16.mxu0 0
    %775 = vmatpush2.bf16.msra.mxu0 0
    %776 = vmatprep.subr.bf16.mxu0 0
    %777 = vmatpush2.bf16.msra.mxu0 0
    %778 = vmatprep.subr.bf16.mxu0 0
    %779 = vmatpush2.bf16.msra.mxu0 0
    %780 = vmatprep.subr.bf16.mxu0 0
    %781 = vmatpush2.bf16.msra.mxu0 0
    %782 = vmatprep.subr.bf16.mxu0 0
    %783 = vmatpush2.bf16.msra.mxu0 0
    %784 = vmatprep.mubr.bf16.mxu0 0
    %785 = vmatmul.mubr.bf16.gmra.mxu0 %v657
    %v786 = vpop.f32.mrf.mxu0
    %v787 = vadd.f32 %v511, %v786
    %v788 = vpop.f32.mrf.mxu0
    %v789 = vpop.f32.mrf.mxu0
    %v790 = vadd.f32 %v511, %v789
    %v791 = vpop.f32.mrf.mxu0
    %792 = vmatprep.mubr.bf16.mxu0 0
    %793 = vmatmul.mubr.bf16.gmra.mxu0 %v660
    %v794 = vpop.f32.mrf.mxu0
    %v795 = vadd.f32 %v511, %v794
    %v796 = vpop.f32.mrf.mxu0
    %v797 = vpop.f32.mrf.mxu0
    %v798 = vadd.f32 %v511, %v797
    %v799 = vpop.f32.mrf.mxu0
    %800 = vmatprep.mubr.bf16.mxu0 0
    %801 = vmatmul.mubr.bf16.gmra.mxu0 %v663
    %v802 = vpop.f32.mrf.mxu0
    %v803 = vadd.f32 %v511, %v802
    %v804 = vpop.f32.mrf.mxu0
    %v805 = vpop.f32.mrf.mxu0
    %v806 = vadd.f32 %v511, %v805
    %v807 = vpop.f32.mrf.mxu0
    %808 = vmatprep.mubr.bf16.mxu0 0
    %809 = vmatmul.mubr.bf16.gmra.mxu0 %v666
    %v810 = vpop.f32.mrf.mxu0
    %v811 = vadd.f32 %v511, %v810
    %v812 = vpop.f32.mrf.mxu0
    %v813 = vpop.f32.mrf.mxu0
    %v814 = vadd.f32 %v511, %v813
    %v815 = vpop.f32.mrf.mxu0
    %816 = vmatprep.mubr.bf16.mxu0 0
    %817 = vmatmul.mubr.bf16.gmra.mxu0 %v669
    %v818 = vpop.f32.mrf.mxu0
    %v819 = vadd.f32 %v511, %v818
    %v820 = vpop.f32.mrf.mxu0
    %v821 = vpop.f32.mrf.mxu0
    %v822 = vadd.f32 %v511, %v821
    %v823 = vpop.f32.mrf.mxu0
    %824 = vmatprep.mubr.bf16.mxu0 0
    %825 = vmatmul.mubr.bf16.gmra.mxu0 %v672
    %v826 = vpop.f32.mrf.mxu0
    %v827 = vadd.f32 %v511, %v826
    %v828 = vpop.f32.mrf.mxu0
    %v829 = vpop.f32.mrf.mxu0
    %v830 = vadd.f32 %v511, %v829
    %v831 = vpop.f32.mrf.mxu0
    %832 = vmatprep.mubr.bf16.mxu0 0
    %833 = vmatmul.mubr.bf16.gmra.mxu0 %v675
    %v834 = vpop.f32.mrf.mxu0
    %v835 = vadd.f32 %v511, %v834
    %v836 = vpop.f32.mrf.mxu0
    %v837 = vpop.f32.mrf.mxu0
    %v838 = vadd.f32 %v511, %v837
    %v839 = vpop.f32.mrf.mxu0
    %840 = vmatprep.mubr.bf16.mxu0 0
    %841 = vmatmul.mubr.bf16.gmra.mxu0 %v678
    %v842 = vpop.f32.mrf.mxu0
    %v843 = vadd.f32 %v511, %v842
    %v844 = vpop.f32.mrf.mxu0
    %v845 = vpop.f32.mrf.mxu0
    %v846 = vadd.f32 %v511, %v845
    %v847 = vpop.f32.mrf.mxu0
    %848 = vmatprep.mubr.bf16.mxu0 0
    %849 = vmatmul.mubr.bf16.gmra.mxu0 %v681
    %v850 = vpop.f32.mrf.mxu0
    %v851 = vadd.f32 %v511, %v850
    %v852 = vpop.f32.mrf.mxu0
    %v853 = vpop.f32.mrf.mxu0
    %v854 = vadd.f32 %v511, %v853
    %v855 = vpop.f32.mrf.mxu0
    %856 = vmatprep.mubr.bf16.mxu0 0
    %857 = vmatmul.mubr.bf16.gmra.mxu0 %v684
    %v858 = vpop.f32.mrf.mxu0
    %v859 = vadd.f32 %v511, %v858
    %v860 = vpop.f32.mrf.mxu0
    %v861 = vpop.f32.mrf.mxu0
    %v862 = vadd.f32 %v511, %v861
    %v863 = vpop.f32.mrf.mxu0
    %864 = vmatprep.mubr.bf16.mxu0 0
    %865 = vmatmul.mubr.bf16.gmra.mxu0 %v687
    %v866 = vpop.f32.mrf.mxu0
    %v867 = vadd.f32 %v511, %v866
    %v868 = vpop.f32.mrf.mxu0
    %v869 = vpop.f32.mrf.mxu0
    %v870 = vadd.f32 %v511, %v869
    %v871 = vpop.f32.mrf.mxu0
    %872 = vmatprep.mubr.bf16.mxu0 0
    %873 = vmatmul.mubr.bf16.gmra.mxu0 %v690
    %v874 = vpop.f32.mrf.mxu0
    %v875 = vadd.f32 %v511, %v874
    %v876 = vpop.f32.mrf.mxu0
    %v877 = vpop.f32.mrf.mxu0
    %v878 = vadd.f32 %v511, %v877
    %v879 = vpop.f32.mrf.mxu0
    %880 = vmatprep.mubr.bf16.mxu0 0
    %881 = vmatmul.mubr.bf16.gmra.mxu0 %v693
    %v882 = vpop.f32.mrf.mxu0
    %v883 = vadd.f32 %v511, %v882
    %v884 = vpop.f32.mrf.mxu0
    %v885 = vpop.f32.mrf.mxu0
    %v886 = vadd.f32 %v511, %v885
    %v887 = vpop.f32.mrf.mxu0
    %888 = vmatprep.mubr.bf16.mxu0 0
    %889 = vmatmul.mubr.bf16.gmra.mxu0 %v696
    %v890 = vpop.f32.mrf.mxu0
    %v891 = vadd.f32 %v511, %v890
    %v892 = vpop.f32.mrf.mxu0
    %v893 = vpop.f32.mrf.mxu0
    %v894 = vadd.f32 %v511, %v893
    %v895 = vpop.f32.mrf.mxu0
    %896 = vmatprep.mubr.bf16.mxu0 0
    %897 = vmatmul.mubr.bf16.gmra.mxu0 %v699
    %v898 = vpop.f32.mrf.mxu0
    %v899 = vadd.f32 %v511, %v898
    %v900 = vpop.f32.mrf.mxu0
    %v901 = vpop.f32.mrf.mxu0
    %v902 = vadd.f32 %v511, %v901
    %v903 = vpop.f32.mrf.mxu0
    %904 = vmatprep.mubr.bf16.mxu0 0
    %905 = vmatmul.mubr.bf16.gmra.mxu0 %v702
    %v906 = vpop.f32.mrf.mxu0
    %v907 = vadd.f32 %v511, %v906
    %v908 = vpop.f32.mrf.mxu0
    %v909 = vpop.f32.mrf.mxu0
    %v910 = vadd.f32 %v511, %v909
    %v911 = vpop.f32.mrf.mxu0
    %912 = vmatprep.mubr.bf16.mxu0 0
    %913 = vmatmul.mubr.bf16.gmra.mxu0 %v705
    %v914 = vpop.f32.mrf.mxu0
    %v915 = vadd.f32 %v511, %v914
    %v916 = vpop.f32.mrf.mxu0
    %v917 = vpop.f32.mrf.mxu0
    %v918 = vadd.f32 %v511, %v917
    %v919 = vpop.f32.mrf.mxu0
    %920 = vmatprep.mubr.bf16.mxu0 0
    %921 = vmatmul.mubr.bf16.gmra.mxu0 %v708
    %v922 = vpop.f32.mrf.mxu0
    %v923 = vadd.f32 %v511, %v922
    %v924 = vpop.f32.mrf.mxu0
    %v925 = vpop.f32.mrf.mxu0
    %v926 = vadd.f32 %v511, %v925
    %v927 = vpop.f32.mrf.mxu0
    %928 = vmatprep.mubr.bf16.mxu0 0
    %929 = vmatmul.mubr.bf16.gmra.mxu0 %v711
    %v930 = vpop.f32.mrf.mxu0
    %v931 = vadd.f32 %v511, %v930
    %v932 = vpop.f32.mrf.mxu0
    %v933 = vpop.f32.mrf.mxu0
    %v934 = vadd.f32 %v511, %v933
    %v935 = vpop.f32.mrf.mxu0
    %936 = vmatprep.mubr.bf16.mxu0 0
    %937 = vmatmul.mubr.bf16.gmra.mxu0 %v714
    %v938 = vpop.f32.mrf.mxu0
    %v939 = vadd.f32 %v511, %v938
    %v940 = vpop.f32.mrf.mxu0
    %v941 = vpop.f32.mrf.mxu0
    %v942 = vadd.f32 %v511, %v941
    %v943 = vpop.f32.mrf.mxu0
    %944 = vmatprep.mubr.bf16.mxu0 0
    %945 = vmatmul.mubr.bf16.gmra.mxu0 %v717
    %v946 = vpop.f32.mrf.mxu0
    %v947 = vadd.f32 %v511, %v946
    %v948 = vpop.f32.mrf.mxu0
    %v949 = vpop.f32.mrf.mxu0
    %v950 = vadd.f32 %v511, %v949
    %v951 = vpop.f32.mrf.mxu0
    %952 = vmatprep.mubr.bf16.mxu0 0
    %953 = vmatmul.mubr.bf16.gmra.mxu0 %v720
    %v954 = vpop.f32.mrf.mxu0
    %v955 = vadd.f32 %v511, %v954
    %v956 = vpop.f32.mrf.mxu0
    %v957 = vpop.f32.mrf.mxu0
    %v958 = vadd.f32 %v511, %v957
    %v959 = vpop.f32.mrf.mxu0
    %960 = vmatprep.mubr.bf16.mxu0 0
    %961 = vmatmul.mubr.bf16.gmra.mxu0 %v723
    %v962 = vpop.f32.mrf.mxu0
    %v963 = vadd.f32 %v511, %v962
    %v964 = vpop.f32.mrf.mxu0
    %v965 = vpop.f32.mrf.mxu0
    %v966 = vadd.f32 %v511, %v965
    %v967 = vpop.f32.mrf.mxu0
    %968 = vmatprep.mubr.bf16.mxu0 0
    %969 = vmatmul.mubr.bf16.gmra.mxu0 %v726
    %v970 = vpop.f32.mrf.mxu0
    %v971 = vadd.f32 %v511, %v970
    %v972 = vpop.f32.mrf.mxu0
    %v973 = vpop.f32.mrf.mxu0
    %v974 = vadd.f32 %v511, %v973
    %v975 = vpop.f32.mrf.mxu0
    %976 = vmatprep.mubr.bf16.mxu0 0
    %977 = vmatmul.mubr.bf16.gmra.mxu0 %v729
    %v978 = vpop.f32.mrf.mxu0
    %v979 = vadd.f32 %v511, %v978
    %v980 = vpop.f32.mrf.mxu0
    %v981 = vpop.f32.mrf.mxu0
    %v982 = vadd.f32 %v511, %v981
    %v983 = vpop.f32.mrf.mxu0
    %984 = vmatprep.mubr.bf16.mxu0 0
    %985 = vmatmul.mubr.bf16.gmra.mxu0 %v732
    %v986 = vpop.f32.mrf.mxu0
    %v987 = vadd.f32 %v511, %v986
    %v988 = vpop.f32.mrf.mxu0
    %v989 = vpop.f32.mrf.mxu0
    %v990 = vadd.f32 %v511, %v989
    %v991 = vpop.f32.mrf.mxu0
    %992 = vmatprep.mubr.bf16.mxu0 0
    %993 = vmatmul.mubr.bf16.gmra.mxu0 %v735
    %v994 = vpop.f32.mrf.mxu0
    %v995 = vadd.f32 %v511, %v994
    %v996 = vpop.f32.mrf.mxu0
    %v997 = vpop.f32.mrf.mxu0
    %v998 = vadd.f32 %v511, %v997
    %v999 = vpop.f32.mrf.mxu0
    %1000 = vmatprep.mubr.bf16.mxu0 0
    %1001 = vmatmul.mubr.bf16.gmra.mxu0 %v738
    %v1002 = vpop.f32.mrf.mxu0
    %v1003 = vadd.f32 %v511, %v1002
    %v1004 = vpop.f32.mrf.mxu0
    %v1005 = vpop.f32.mrf.mxu0
    %v1006 = vadd.f32 %v511, %v1005
    %v1007 = vpop.f32.mrf.mxu0
    %1008 = vmatprep.mubr.bf16.mxu0 0
    %1009 = vmatmul.mubr.bf16.gmra.mxu0 %v741
    %v1010 = vpop.f32.mrf.mxu0
    %v1011 = vadd.f32 %v511, %v1010
    %v1012 = vpop.f32.mrf.mxu0
    %v1013 = vpop.f32.mrf.mxu0
    %v1014 = vadd.f32 %v511, %v1013
    %v1015 = vpop.f32.mrf.mxu0
    %1016 = vmatprep.mubr.bf16.mxu0 0
    %1017 = vmatmul.mubr.bf16.gmra.mxu0 %v744
    %v1018 = vpop.f32.mrf.mxu0
    %v1019 = vadd.f32 %v511, %v1018
    %v1020 = vpop.f32.mrf.mxu0
    %v1021 = vpop.f32.mrf.mxu0
    %v1022 = vadd.f32 %v511, %v1021
    %v1023 = vpop.f32.mrf.mxu0
    %1024 = vmatprep.mubr.bf16.mxu0 0
    %1025 = vmatmul.mubr.bf16.gmra.mxu0 %v747
    %v1026 = vpop.f32.mrf.mxu0
    %v1027 = vadd.f32 %v511, %v1026
    %v1028 = vpop.f32.mrf.mxu0
    %v1029 = vpop.f32.mrf.mxu0
    %v1030 = vadd.f32 %v511, %v1029
    %v1031 = vpop.f32.mrf.mxu0
    %1032 = vmatprep.mubr.bf16.mxu0 0
    %1033 = vmatmul.mubr.bf16.gmra.mxu0 %v750
    %v1034 = vpop.f32.mrf.mxu0
    %v1035 = vadd.f32 %v511, %v1034
    %v1036 = vpop.f32.mrf.mxu0
    %v1037 = vpop.f32.mrf.mxu0
    %v1038 = vadd.f32 %v511, %v1037
    %v1039 = vpop.f32.mrf.mxu0
    %1040 = vdwg.mxu0
    %v1041 = vmax.f32 %v787, 0.0
    %v1042 = vmax.f32 %v790, 0.0
    %v1043 = vmax.f32 %v795, 0.0
    %v1044 = vmax.f32 %v798, 0.0
    %v1045 = vmax.f32 %v803, 0.0
    %v1046 = vmax.f32 %v806, 0.0
    %v1047 = vmax.f32 %v811, 0.0
    %v1048 = vmax.f32 %v814, 0.0
    %v1049 = vmax.f32 %v819, 0.0
    %v1050 = vmax.f32 %v822, 0.0
    %v1051 = vmax.f32 %v827, 0.0
    %v1052 = vmax.f32 %v830, 0.0
    %v1053 = vmax.f32 %v835, 0.0
    %v1054 = vmax.f32 %v838, 0.0
    %v1055 = vmax.f32 %v843, 0.0
    %v1056 = vmax.f32 %v846, 0.0
    %v1057 = vmax.f32 %v851, 0.0
    %v1058 = vmax.f32 %v854, 0.0
    %v1059 = vmax.f32 %v859, 0.0
    %v1060 = vmax.f32 %v862, 0.0
    %v1061 = vmax.f32 %v867, 0.0
    %v1062 = vmax.f32 %v870, 0.0
    %v1063 = vmax.f32 %v875, 0.0
    %v1064 = vmax.f32 %v878, 0.0
    %v1065 = vmax.f32 %v883, 0.0
    %v1066 = vmax.f32 %v886, 0.0
    %v1067 = vmax.f32 %v891, 0.0
    %v1068 = vmax.f32 %v894, 0.0
    %v1069 = vmax.f32 %v899, 0.0
    %v1070 = vmax.f32 %v902, 0.0
    %v1071 = vmax.f32 %v907, 0.0
    %v1072 = vmax.f32 %v910, 0.0
    %v1073 = vmax.f32 %v915, 0.0
    %v1074 = vmax.f32 %v918, 0.0
    %v1075 = vmax.f32 %v923, 0.0
    %v1076 = vmax.f32 %v926, 0.0
    %v1077 = vmax.f32 %v931, 0.0
    %v1078 = vmax.f32 %v934, 0.0
    %v1079 = vmax.f32 %v939, 0.0
    %v1080 = vmax.f32 %v942, 0.0
    %v1081 = vmax.f32 %v947, 0.0
    %v1082 = vmax.f32 %v950, 0.0
    %v1083 = vmax.f32 %v955, 0.0
    %v1084 = vmax.f32 %v958, 0.0
    %v1085 = vmax.f32 %v963, 0.0
    %v1086 = vmax.f32 %v966, 0.0
    %v1087 = vmax.f32 %v971, 0.0
    %v1088 = vmax.f32 %v974, 0.0
    %v1089 = vmax.f32 %v979, 0.0
    %v1090 = vmax.f32 %v982, 0.0
    %v1091 = vmax.f32 %v987, 0.0
    %v1092 = vmax.f32 %v990, 0.0
    %v1093 = vmax.f32 %v995, 0.0
    %v1094 = vmax.f32 %v998, 0.0
    %v1095 = vmax.f32 %v1003, 0.0
    %v1096 = vmax.f32 %v1006, 0.0
    %v1097 = vmax.f32 %v1011, 0.0
    %v1098 = vmax.f32 %v1014, 0.0
    %v1099 = vmax.f32 %v1019, 0.0
    %v1100 = vmax.f32 %v1022, 0.0
    %v1101 = vmax.f32 %v1027, 0.0
    %v1102 = vmax.f32 %v1030, 0.0
    %v1103 = vmax.f32 %v1035, 0.0
    %v1104 = vmax.f32 %v1038, 0.0
    %v1105 = vmax.f32 %v1041, %v1043
    %v1106 = vmax.f32 %v1042, %v1044
    %v1107 = vmax.f32 %v1105, %v1045
    %v1108 = vmax.f32 %v1106, %v1046
    %v1109 = vmax.f32 %v1107, %v1047
    %v1110 = vmax.f32 %v1108, %v1048
    %v1111 = vmax.f32 %v1109, %v1049
    %v1112 = vmax.f32 %v1110, %v1050
    %v1113 = vmax.f32 %v1111, %v1051
    %v1114 = vmax.f32 %v1112, %v1052
    %v1115 = vmax.f32 %v1113, %v1053
    %v1116 = vmax.f32 %v1114, %v1054
    %v1117 = vmax.f32 %v1115, %v1055
    %v1118 = vmax.f32 %v1116, %v1056
    %v1119 = vmax.f32 %v1117, %v1057
    %v1120 = vmax.f32 %v1118, %v1058
    %v1121 = vmax.f32 %v1119, %v1059
    %v1122 = vmax.f32 %v1120, %v1060
    %v1123 = vmax.f32 %v1121, %v1061
    %v1124 = vmax.f32 %v1122, %v1062
    %v1125 = vmax.f32 %v1123, %v1063
    %v1126 = vmax.f32 %v1124, %v1064
    %v1127 = vmax.f32 %v1125, %v1065
    %v1128 = vmax.f32 %v1126, %v1066
    %v1129 = vmax.f32 %v1127, %v1067
    %v1130 = vmax.f32 %v1128, %v1068
    %v1131 = vmax.f32 %v1129, %v1069
    %v1132 = vmax.f32 %v1130, %v1070
    %v1133 = vmax.f32 %v1131, %v1071
    %v1134 = vmax.f32 %v1132, %v1072
    %v1135 = vmax.f32 %v1133, %v1134
    %v1136 = vrot.slane %v1135, 4
    %v1137 = vmax.f32 %v1135, %v1136
    %v1138 = vrot.slane %v1137, 2
    %v1139 = vmax.f32 %v1137, %v1138
    %v1140 = vrot.slane %v1139, 1
    %v1141 = vmax.f32 %v1139, %v1140
    %v1142 = vmax.f32 %v1073, %v1075
    %v1143 = vmax.f32 %v1074, %v1076
    %v1144 = vmax.f32 %v1142, %v1077
    %v1145 = vmax.f32 %v1143, %v1078
    %v1146 = vmax.f32 %v1144, %v1079
    %v1147 = vmax.f32 %v1145, %v1080
    %v1148 = vmax.f32 %v1146, %v1081
    %v1149 = vmax.f32 %v1147, %v1082
    %v1150 = vmax.f32 %v1148, %v1083
    %v1151 = vmax.f32 %v1149, %v1084
    %v1152 = vmax.f32 %v1150, %v1085
    %v1153 = vmax.f32 %v1151, %v1086
    %v1154 = vmax.f32 %v1152, %v1087
    %v1155 = vmax.f32 %v1153, %v1088
    %v1156 = vmax.f32 %v1154, %v1089
    %v1157 = vmax.f32 %v1155, %v1090
    %v1158 = vmax.f32 %v1156, %v1091
    %v1159 = vmax.f32 %v1157, %v1092
    %v1160 = vmax.f32 %v1158, %v1093
    %v1161 = vmax.f32 %v1159, %v1094
    %v1162 = vmax.f32 %v1160, %v1095
    %v1163 = vmax.f32 %v1161, %v1096
    %v1164 = vmax.f32 %v1162, %v1097
    %v1165 = vmax.f32 %v1163, %v1098
    %v1166 = vmax.f32 %v1164, %v1099
    %v1167 = vmax.f32 %v1165, %v1100
    %v1168 = vmax.f32 %v1166, %v1101
    %v1169 = vmax.f32 %v1167, %v1102
    %v1170 = vmax.f32 %v1168, %v1103
    %v1171 = vmax.f32 %v1169, %v1104
    %v1172 = vmax.f32 %v1170, %v1171
    %v1173 = vrot.slane %v1172, 4
    %v1174 = vmax.f32 %v1172, %v1173
    %v1175 = vrot.slane %v1174, 2
    %v1176 = vmax.f32 %v1174, %v1175
    %v1177 = vrot.slane %v1176, 1
    %v1178 = vmax.f32 %v1176, %v1177
    %v1179 = vadd.f32 %v1041, %v1042
    %v1180 = vadd.f32 %v1179, %v1043
    %v1181 = vadd.f32 %v1180, %v1044
    %v1182 = vadd.f32 %v1181, %v1045
    %v1183 = vadd.f32 %v1182, %v1046
    %v1184 = vadd.f32 %v1183, %v1047
    %v1185 = vadd.f32 %v1184, %v1048
    %v1186 = vadd.f32 %v1185, %v1049
    %v1187 = vadd.f32 %v1186, %v1050
    %v1188 = vadd.f32 %v1187, %v1051
    %v1189 = vadd.f32 %v1188, %v1052
    %v1190 = vadd.f32 %v1189, %v1053
    %v1191 = vadd.f32 %v1190, %v1054
    %v1192 = vadd.f32 %v1191, %v1055
    %v1193 = vadd.f32 %v1192, %v1056
    %v1194 = vadd.f32 %v1193, %v1057
    %v1195 = vadd.f32 %v1194, %v1058
    %v1196 = vadd.f32 %v1195, %v1059
    %v1197 = vadd.f32 %v1196, %v1060
    %v1198 = vadd.f32 %v1197, %v1061
    %v1199 = vadd.f32 %v1198, %v1062
    %v1200 = vadd.f32 %v1199, %v1063
    %v1201 = vadd.f32 %v1200, %v1064
    %v1202 = vadd.f32 %v1201, %v1065
    %v1203 = vadd.f32 %v1202, %v1066
    %v1204 = vadd.f32 %v1203, %v1067
    %v1205 = vadd.f32 %v1204, %v1068
    %v1206 = vadd.f32 %v1205, %v1069
    %v1207 = vadd.f32 %v1206, %v1070
    %v1208 = vadd.f32 %v1207, %v1071
    %v1209 = vadd.f32 %v1208, %v1072
    %v1210 = vrot.slane %v1209, 4
    %v1211 = vadd.f32 %v1209, %v1210
    %v1212 = vrot.slane %v1211, 2
    %v1213 = vadd.f32 %v1211, %v1212
    %v1214 = vrot.slane %v1213, 1
    %v1215 = vadd.f32 %v1213, %v1214
    %v1216 = vadd.f32 %v1073, %v1074
    %v1217 = vadd.f32 %v1216, %v1075
    %v1218 = vadd.f32 %v1217, %v1076
    %v1219 = vadd.f32 %v1218, %v1077
    %v1220 = vadd.f32 %v1219, %v1078
    %v1221 = vadd.f32 %v1220, %v1079
    %v1222 = vadd.f32 %v1221, %v1080
    %v1223 = vadd.f32 %v1222, %v1081
    %v1224 = vadd.f32 %v1223, %v1082
    %v1225 = vadd.f32 %v1224, %v1083
    %v1226 = vadd.f32 %v1225, %v1084
    %v1227 = vadd.f32 %v1226, %v1085
    %v1228 = vadd.f32 %v1227, %v1086
    %v1229 = vadd.f32 %v1228, %v1087
    %v1230 = vadd.f32 %v1229, %v1088
    %v1231 = vadd.f32 %v1230, %v1089
    %v1232 = vadd.f32 %v1231, %v1090
    %v1233 = vadd.f32 %v1232, %v1091
    %v1234 = vadd.f32 %v1233, %v1092
    %v1235 = vadd.f32 %v1234, %v1093
    %v1236 = vadd.f32 %v1235, %v1094
    %v1237 = vadd.f32 %v1236, %v1095
    %v1238 = vadd.f32 %v1237, %v1096
    %v1239 = vadd.f32 %v1238, %v1097
    %v1240 = vadd.f32 %v1239, %v1098
    %v1241 = vadd.f32 %v1240, %v1099
    %v1242 = vadd.f32 %v1241, %v1100
    %v1243 = vadd.f32 %v1242, %v1101
    %v1244 = vadd.f32 %v1243, %v1102
    %v1245 = vadd.f32 %v1244, %v1103
    %v1246 = vadd.f32 %v1245, %v1104
    %v1247 = vrot.slane %v1246, 4
    %v1248 = vadd.f32 %v1246, %v1247
    %v1249 = vrot.slane %v1248, 2
    %v1250 = vadd.f32 %v1248, %v1249
    %v1251 = vrot.slane %v1250, 1
    %v1252 = vadd.f32 %v1250, %v1251
    %v1253 = vmul.f32 %v1215, 0.00390625
    %v1254 = vmul.f32 %v1252, 0.00390625
    %vm1257 = vcmask 1041409
    %v1258 = vsel %vm1257, %v1178, %v1141
    %v1261 = vsel %vm1257, %v1254, %v1253
    %v1262 = vcombine.low %v1258, %v1261
    %v1264 = vunpack.c.l.s4 1983009808
    %v1265 = vunpack.c.0.s8 %v1264
    %v1266 = vlaneseq
    %v1267 = vshrl.u32 %v1266, 7
    %v1268 = vsub.s32 %v1265, %v1267
    %v1269 = vrot.slane %v1262, %v1268
    %1271 = vst [vmem:[%s4] sm:$0xf] %v1269
    // Predicated region
    $region22: #{xxxface_forward.2} parent=1 // pred_check
      _
    $region23: #{xxxface_forward.2} parent=1 // pred_check_branch
      %1273 = sbr.rel (0) target = $region25
    $region24: #{xxxface_forward.2} parent=1 // pred_region
      _
    $region25: #{xxxface_forward.2} parent=1 // pred_fallthru
      _
    // Predicated region
    $region26: #{xxxface_forward.2} parent=1 // pred_check
      _
    $region27: #{xxxface_forward.2} parent=1 // pred_check_branch
      %1275 = sbr.rel (0) target = $region29
    $region28: #{xxxface_forward.2} parent=1 // pred_region
      _
    $region29: #{xxxface_forward.2} parent=1 // pred_fallthru
      _
    %1276 = vsyncpa [#allocation4], 1

</llo_original>
